<compile_context>
chip_gen: v7x
topology: tpu7x:2x2x1
jax: 0.10.0
libtpu: 0.0.40
codegen_flags: <defaults>
</compile_context>

<pallas_src>
import numpy as np
import jax
import jax.numpy as jnp
from jax.experimental import pallas as pl
from jax.experimental.pallas import tpu as pltpu


_LANE_PAD = 128  # aligned left/right zero padding; covers |dy*W + dx| for W <= 127


# ----------------------------- Pallas kernels -----------------------------


def _conv_body(x_ref, w_ref, b_ref, m_ref, sc_ref, sh_ref,
               y_ref, s_ref, ss_ref, *, apply_input_bnrelu, W):
    """(optional fused BN+ReLU) -> 3x3 'same' conv -> bias -> BN partial stats.

    Channel-major layout with the flattened spatial dim on lanes:
      x_ref  : (1, Cin, H*W)         input image (f32 conv1 / bf16 conv2)
      w_ref  : (Cout, 9*Cin) bf16    im2col weights, tap-major (ky*3+kx)*Cin+ci
      b_ref  : (Cout, 1)     f32     bias
      m_ref  : (3, H*W)      bf16    column-validity masks for dx in {-1,0,+1}
      sc_ref : (Cin, 1)      f32     previous-layer BN scale (conv2 only)
      sh_ref : (Cin, 1)      f32     previous-layer BN shift (conv2 only)
      y_ref  : (1, Cout, H*W) bf16   conv output (pre-BN), lane-dense
      s_ref  : (1, Cout, 1)  f32     per-image per-channel sum of y
      ss_ref : (1, Cout, 1)  f32     per-image per-channel sum of y*y
    """
    Cin = x_ref.shape[1]
    HW = x_ref.shape[2]

    x = x_ref[0].astype(jnp.float32)                      # (Cin, HW), lane-dense load
    if apply_input_bnrelu:
        # Fused BatchNorm affine + ReLU of the previous layer (f32 on the VPU).
        x = jnp.maximum(x * sc_ref[...] + sh_ref[...], 0.0)
    x_bf = x.astype(jnp.bfloat16)                         # cast exactly once

    # Aligned lane zero-padding: xe[:, _LANE_PAD + p] == x[:, p]. Taps that
    # read above/below the image land in the zero pad (handles the dy border).
    zpad = jnp.zeros((Cin, _LANE_PAD), jnp.bfloat16)
    xe = jnp.concatenate([zpad, x_bf, zpad], axis=1)      # (Cin, HW + 256) bf16

    # im2col patches: nine statically shifted lane slices stacked along K.
    # dx = +-1 taps also need the column mask so values do not wrap across the
    # left/right image border.
    taps = []
    for dy in (-1, 0, 1):
        for dx in (-1, 0, 1):
            off = _LANE_PAD + dy * W + dx
            taps.append(xe[:, off:off + HW] * m_ref[dx + 1])
    patches = jnp.concatenate(taps, axis=0)               # (9*Cin, HW) bf16

    # One MXU matmul per image (K = 9*Cin), f32 accumulation, fused bias add.
    y = jax.lax.dot_general(
        w_ref[...], patches,
        dimension_numbers=(((1,), (0,)), ((), ())),
        preferred_element_type=jnp.float32) + b_ref[...]  # (Cout, HW) f32

    # Round once to the bf16 storage dtype; BN statistics use the rounded
    # values so they match exactly what the next stage reads back from HBM.
    y_q = y.astype(jnp.bfloat16)
    y_ref[0] = y_q                                        # lane-dense store
    y_f = y_q.astype(jnp.float32)
    s_ref[0] = jnp.sum(y_f, axis=1, keepdims=True)
    ss_ref[0] = jnp.sum(y_f * y_f, axis=1, keepdims=True)


def _bn_relu_kernel(y_ref, sc_ref, sh_ref, o_ref):
    """Fused BN affine + ReLU; (1, C, H*W) bf16 in -> (1, C, H*W) f32 out."""
    o_ref[0] = jnp.maximum(
        y_ref[0].astype(jnp.float32) * sc_ref[...] + sh_ref[...], 0.0)


# ------------------------------ host wrappers ------------------------------


def conv3x3_bias_stats(x_flat, w_taps, b, col_masks, H, W,
                       in_scale=None, in_shift=None):
    """Fused 3x3 'same' conv (+ optional fused input BN+ReLU) + bias + BN stats.

    x_flat: (N, Cin, H*W); w_taps: (Cout, 9*Cin) bf16; b: (Cout,) f32.
    Returns (y_bf16 (N, Cout, H*W), sums (N, Cout, 1), sumsqs (N, Cout, 1)).
    """
    N, Cin, HW = x_flat.shape
    Cout = w_taps.shape[0]
    apply_in = in_scale is not None

    if apply_in:
        def kernel(x_ref, w_ref, b_ref, m_ref, sc_ref, sh_ref,
                   y_ref, s_ref, ss_ref):
            _conv_body(x_ref, w_ref, b_ref, m_ref, sc_ref, sh_ref,
                       y_ref, s_ref, ss_ref, apply_input_bnrelu=True, W=W)
    else:
        def kernel(x_ref, w_ref, b_ref, m_ref, y_ref, s_ref, ss_ref):
            _conv_body(x_ref, w_ref, b_ref, m_ref, None, None,
                       y_ref, s_ref, ss_ref, apply_input_bnrelu=False, W=W)

    in_specs = [
        pl.BlockSpec((1, Cin, HW), lambda n: (n, 0, 0)),
        pl.BlockSpec((Cout, 9 * Cin), lambda n: (0, 0)),
        pl.BlockSpec((Cout, 1), lambda n: (0, 0)),
        pl.BlockSpec((3, HW), lambda n: (0, 0)),
    ]
    args = [x_flat, w_taps, b.reshape(Cout, 1), col_masks]
    if apply_in:
        in_specs += [pl.BlockSpec((Cin, 1), lambda n: (0, 0)),
                     pl.BlockSpec((Cin, 1), lambda n: (0, 0))]
        args += [in_scale.reshape(Cin, 1), in_shift.reshape(Cin, 1)]

    return pl.pallas_call(
        kernel,
        out_shape=(
            jax.ShapeDtypeStruct((N, Cout, HW), jnp.bfloat16),
            jax.ShapeDtypeStruct((N, Cout, 1), jnp.float32),
            jax.ShapeDtypeStruct((N, Cout, 1), jnp.float32),
        ),
        grid=(N,),
        in_specs=in_specs,
        out_specs=(
            pl.BlockSpec((1, Cout, HW), lambda n: (n, 0, 0)),
            pl.BlockSpec((1, Cout, 1), lambda n: (n, 0, 0)),
            pl.BlockSpec((1, Cout, 1), lambda n: (n, 0, 0)),
        ),
        compiler_params=pltpu.CompilerParams(
            dimension_semantics=("parallel",)),
    )(*args)


def batchnorm_relu(y_flat, scale, shift):
    """Final fused BN affine + ReLU; lane-dense (N, C, H*W) bf16 -> f32."""
    N, C, HW = y_flat.shape
    return pl.pallas_call(
        _bn_relu_kernel,
        out_shape=jax.ShapeDtypeStruct((N, C, HW), jnp.float32),
        grid=(N,),
        in_specs=[
            pl.BlockSpec((1, C, HW), lambda n: (n, 0, 0)),
            pl.BlockSpec((C, 1), lambda n: (0, 0)),
            pl.BlockSpec((C, 1), lambda n: (0, 0)),
        ],
        out_specs=pl.BlockSpec((1, C, HW), lambda n: (n, 0, 0)),
        compiler_params=pltpu.CompilerParams(
            dimension_semantics=("parallel",)),
    )(y_flat, scale.reshape(C, 1), shift.reshape(C, 1))


def _finish_batchnorm(psum, psumsq, gamma, beta, count, eps=1e-5):
    """Tiny (C,) math turning partial sums into training-mode BN scale/shift."""
    total = jnp.sum(psum[..., 0], axis=0)        # (C,)
    total_sq = jnp.sum(psumsq[..., 0], axis=0)   # (C,)
    mean = total / count
    var = jnp.maximum(total_sq / count - mean * mean, 0.0)   # biased variance
    scale = gamma * jax.lax.rsqrt(var + eps)
    shift = beta - mean * scale
    return scale, shift


def _im2col_weights(w_oihw):
    """(Cout, Cin, 3, 3) OIHW -> (Cout, 9*Cin) bf16, tap-major (ky*3+kx)*Cin+ci."""
    Cout, Cin = w_oihw.shape[0], w_oihw.shape[1]
    return jnp.transpose(w_oihw, (0, 2, 3, 1)).reshape(Cout, 9 * Cin).astype(
        jnp.bfloat16)


def _column_masks(H, W):
    """(3, H*W) bf16 constants: masks[dx+1, p] == 1 iff 0 <= (p % W) + dx < W."""
    col = np.arange(H * W) % W
    m = np.stack([((col + dx >= 0) & (col + dx < W)) for dx in (-1, 0, 1)])
    return jnp.asarray(m, dtype=jnp.bfloat16)


def init_double_conv_params(key, in_ch, out_ch):
    """Deterministic synthetic parameters matching DoubleConv's shapes."""
    ks = jax.random.split(key, 6)
    w1 = jax.random.normal(ks[0], (out_ch, in_ch, 3, 3), jnp.float32) * 0.1
    b1 = jax.random.normal(ks[1], (out_ch,), jnp.float32) * 0.1
    w2 = jax.random.normal(ks[2], (out_ch, out_ch, 3, 3), jnp.float32) * 0.1
    b2 = jax.random.normal(ks[3], (out_ch,), jnp.float32) * 0.1
    g1 = 1.0 + 0.1 * jax.random.normal(ks[4], (out_ch,), jnp.float32)
    be1 = jnp.zeros((out_ch,), jnp.float32)
    g2 = 1.0 + 0.1 * jax.random.normal(ks[5], (out_ch,), jnp.float32)
    be2 = jnp.zeros((out_ch,), jnp.float32)
    return dict(w1=w1, b1=b1, g1=g1, be1=be1, w2=w2, b2=b2, g2=g2, be2=be2)


@jax.jit
def double_conv(x_nchw, params):
    """DoubleConv forward pass. Input/output are NCHW like PyTorch."""
    N, Cin, H, W = x_nchw.shape
    HW = H * W
    count = float(N * HW)

    # Row-major collapse of the spatial dims is free; no transpose passes.
    x_flat = x_nchw.astype(jnp.float32).reshape(N, Cin, HW)
    masks = _column_masks(H, W)
    w1 = _im2col_weights(params["w1"])
    w2 = _im2col_weights(params["w2"])

    # conv1 + bias + BN1 partial statistics, one fused kernel.
    y1, s1, ss1 = conv3x3_bias_stats(x_flat, w1, params["b1"], masks, H, W)
    scale1, shift1 = _finish_batchnorm(s1, ss1, params["g1"], params["be1"], count)

    # BN1 affine + ReLU fused into conv2's input path; conv2 + bias + BN2 stats.
    y2, s2, ss2 = conv3x3_bias_stats(y1, w2, params["b2"], masks, H, W,
                                     in_scale=scale1, in_shift=shift1)
    scale2, shift2 = _finish_batchnorm(s2, ss2, params["g2"], params["be2"], count)

    # Final BN2 affine + ReLU, lane-dense elementwise kernel.
    out = batchnorm_relu(y2, scale2, shift2)
    return out.reshape(N, -1, H, W)                        # free expand -> NCHW


def double_conv_reference(x_nchw, params, eps=1e-5):
    """Pure-JAX f32 reference with PyTorch training-mode BN semantics."""
    def conv(x, w_oihw, b):
        y = jax.lax.conv_general_dilated(
            x, w_oihw, window_strides=(1, 1), padding="SAME",
            dimension_numbers=("NCHW", "OIHW", "NCHW"))
        return y + b[None, :, None, None]

    def bn_relu(y, gamma, beta):
        mean = jnp.mean(y, axis=(0, 2, 3), keepdims=True)
        var = jnp.mean(jnp.square(y - mean), axis=(0, 2, 3), keepdims=True)
        yhat = (y - mean) * jax.lax.rsqrt(var + eps)
        return jnp.maximum(
            yhat * gamma[None, :, None, None] + beta[None, :, None, None], 0.0)

    y = bn_relu(conv(x_nchw, params["w1"], params["b1"]), params["g1"], params["be1"])
    y = bn_relu(conv(y, params["w2"], params["b2"]), params["g2"], params["be2"])
    return y


# ----------------------------------- main -----------------------------------

if __name__ == "__main__":
    key = jax.random.PRNGKey(0)
    k_x, k_p = jax.random.split(key)

    N, IN_CH, OUT_CH, H, W = 2, 4, 8, 16, 16
    x = jax.random.normal(k_x, (N, IN_CH, H, W), jnp.float32)  # NCHW like PyTorch
    params = init_double_conv_params(k_p, IN_CH, OUT_CH)

    out = jax.block_until_ready(double_conv(x, params))

    assert out.shape == (N, OUT_CH, H, W), out.shape
    assert bool(jnp.all(jnp.isfinite(out)))
    assert bool(jnp.all(out >= 0.0))  # ReLU output is non-negative

    # Check against a pure-JAX f32 reference (bf16 MXU operands and bf16
    # intermediate storage => loose tolerance).
    ref = jax.block_until_ready(double_conv_reference(x, params))
    max_err = float(jnp.max(jnp.abs(out - ref)))
    assert max_err < 2e-1, f"max abs err vs reference too large: {max_err}"

    print("KERNEL_OK")
</pallas_src>

<mosaic_0001>
module attributes {stable_mosaic.version = 11 : i64} {
  func.func @kernel(%arg0: i32, %arg1: memref<1x4x256xf32, #tpu.memory_space<vmem>>, %arg2: memref<8x36xbf16, #tpu.memory_space<vmem>>, %arg3: memref<8x1xf32, #tpu.memory_space<vmem>>, %arg4: memref<3x256xbf16, #tpu.memory_space<vmem>>, %arg5: memref<1x8x256xbf16, #tpu.memory_space<vmem>>, %arg6: memref<1x8x1xf32, #tpu.memory_space<vmem>>, %arg7: memref<1x8x1xf32, #tpu.memory_space<vmem>>) attributes {dimension_semantics = [#tpu.dimension_semantics<parallel>], iteration_bounds = array<i64: 2>, scalar_prefetch = 0 : i64, scratch_operands = 0 : i64, tpu.core_type = #tpu.core_type<tc>, window_params = [{transform_indices = @transform_0, window_bounds = array<i64: 1, 4, 256>}, {pipeline_mode = #tpu.pipeline_mode<synchronous>, transform_indices = @transform_1, window_bounds = array<i64: 8, 36>}, {pipeline_mode = #tpu.pipeline_mode<synchronous>, transform_indices = @transform_2, window_bounds = array<i64: 8, 1>}, {pipeline_mode = #tpu.pipeline_mode<synchronous>, transform_indices = @transform_3, window_bounds = array<i64: 3, 256>}, {transform_indices = @transform_4, window_bounds = array<i64: 1, 8, 256>}, {transform_indices = @transform_5, window_bounds = array<i64: 1, 8, 1>}, {transform_indices = @transform_6, window_bounds = array<i64: 1, 8, 1>}]} {
    %c0 = arith.constant 0 : index
    %c0_0 = arith.constant 0 : index
    %c0_1 = arith.constant 0 : index
    %0 = vector.load %arg1[%c0, %c0_0, %c0_1] : memref<1x4x256xf32, #tpu.memory_space<vmem>>, vector<1x4x256xf32>
    %1 = vector.shape_cast %0 : vector<1x4x256xf32> to vector<4x256xf32>
    %2 = arith.truncf %1 : vector<4x256xf32> to vector<4x256xbf16>
    %cst = arith.constant 0.000000e+00 : bf16
    %3 = vector.broadcast %cst : bf16 to vector<4x128xbf16>
    %4 = tpu.concatenate %3, %2, %3 in 1 : vector<4x128xbf16>, vector<4x256xbf16>, vector<4x128xbf16> -> vector<4x512xbf16>
    %5 = vector.extract_strided_slice %4 {offsets = [0, 111], sizes = [4, 256], strides = [1, 1]} : vector<4x512xbf16> to vector<4x256xbf16>
    %c0_2 = arith.constant 0 : index
    %c0_3 = arith.constant 0 : index
    %6 = vector.load %arg4[%c0_2, %c0_3] : memref<3x256xbf16, #tpu.memory_space<vmem>>, vector<1x256xbf16>
    %7 = vector.shape_cast %6 : vector<1x256xbf16> to vector<256xbf16>
    %8 = vector.shape_cast %7 : vector<256xbf16> to vector<1x256xbf16>
    %9 = vector.broadcast %8 : vector<1x256xbf16> to vector<4x256xbf16>
    %10 = arith.mulf %5, %9 : vector<4x256xbf16>
    %11 = vector.extract_strided_slice %4 {offsets = [0, 112], sizes = [4, 256], strides = [1, 1]} : vector<4x512xbf16> to vector<4x256xbf16>
    %c1 = arith.constant 1 : index
    %c0_4 = arith.constant 0 : index
    %12 = vector.load %arg4[%c1, %c0_4] : memref<3x256xbf16, #tpu.memory_space<vmem>>, vector<1x256xbf16>
    %13 = vector.shape_cast %12 : vector<1x256xbf16> to vector<256xbf16>
    %14 = vector.shape_cast %13 : vector<256xbf16> to vector<1x256xbf16>
    %15 = vector.broadcast %14 : vector<1x256xbf16> to vector<4x256xbf16>
    %16 = arith.mulf %11, %15 : vector<4x256xbf16>
    %17 = vector.extract_strided_slice %4 {offsets = [0, 113], sizes = [4, 256], strides = [1, 1]} : vector<4x512xbf16> to vector<4x256xbf16>
    %c2 = arith.constant 2 : index
    %c0_5 = arith.constant 0 : index
    %18 = vector.load %arg4[%c2, %c0_5] : memref<3x256xbf16, #tpu.memory_space<vmem>>, vector<1x256xbf16>
    %19 = vector.shape_cast %18 : vector<1x256xbf16> to vector<256xbf16>
    %20 = vector.shape_cast %19 : vector<256xbf16> to vector<1x256xbf16>
    %21 = vector.broadcast %20 : vector<1x256xbf16> to vector<4x256xbf16>
    %22 = arith.mulf %17, %21 : vector<4x256xbf16>
    %23 = vector.extract_strided_slice %4 {offsets = [0, 127], sizes = [4, 256], strides = [1, 1]} : vector<4x512xbf16> to vector<4x256xbf16>
    %c0_6 = arith.constant 0 : index
    %c0_7 = arith.constant 0 : index
    %24 = vector.load %arg4[%c0_6, %c0_7] : memref<3x256xbf16, #tpu.memory_space<vmem>>, vector<1x256xbf16>
    %25 = vector.shape_cast %24 : vector<1x256xbf16> to vector<256xbf16>
    %26 = vector.shape_cast %25 : vector<256xbf16> to vector<1x256xbf16>
    %27 = vector.broadcast %26 : vector<1x256xbf16> to vector<4x256xbf16>
    %28 = arith.mulf %23, %27 : vector<4x256xbf16>
    %29 = vector.extract_strided_slice %4 {offsets = [0, 128], sizes = [4, 256], strides = [1, 1]} : vector<4x512xbf16> to vector<4x256xbf16>
    %c1_8 = arith.constant 1 : index
    %c0_9 = arith.constant 0 : index
    %30 = vector.load %arg4[%c1_8, %c0_9] : memref<3x256xbf16, #tpu.memory_space<vmem>>, vector<1x256xbf16>
    %31 = vector.shape_cast %30 : vector<1x256xbf16> to vector<256xbf16>
    %32 = vector.shape_cast %31 : vector<256xbf16> to vector<1x256xbf16>
    %33 = vector.broadcast %32 : vector<1x256xbf16> to vector<4x256xbf16>
    %34 = arith.mulf %29, %33 : vector<4x256xbf16>
    %35 = vector.extract_strided_slice %4 {offsets = [0, 129], sizes = [4, 256], strides = [1, 1]} : vector<4x512xbf16> to vector<4x256xbf16>
    %c2_10 = arith.constant 2 : index
    %c0_11 = arith.constant 0 : index
    %36 = vector.load %arg4[%c2_10, %c0_11] : memref<3x256xbf16, #tpu.memory_space<vmem>>, vector<1x256xbf16>
    %37 = vector.shape_cast %36 : vector<1x256xbf16> to vector<256xbf16>
    %38 = vector.shape_cast %37 : vector<256xbf16> to vector<1x256xbf16>
    %39 = vector.broadcast %38 : vector<1x256xbf16> to vector<4x256xbf16>
    %40 = arith.mulf %35, %39 : vector<4x256xbf16>
    %41 = vector.extract_strided_slice %4 {offsets = [0, 143], sizes = [4, 256], strides = [1, 1]} : vector<4x512xbf16> to vector<4x256xbf16>
    %c0_12 = arith.constant 0 : index
    %c0_13 = arith.constant 0 : index
    %42 = vector.load %arg4[%c0_12, %c0_13] : memref<3x256xbf16, #tpu.memory_space<vmem>>, vector<1x256xbf16>
    %43 = vector.shape_cast %42 : vector<1x256xbf16> to vector<256xbf16>
    %44 = vector.shape_cast %43 : vector<256xbf16> to vector<1x256xbf16>
    %45 = vector.broadcast %44 : vector<1x256xbf16> to vector<4x256xbf16>
    %46 = arith.mulf %41, %45 : vector<4x256xbf16>
    %47 = vector.extract_strided_slice %4 {offsets = [0, 144], sizes = [4, 256], strides = [1, 1]} : vector<4x512xbf16> to vector<4x256xbf16>
    %c1_14 = arith.constant 1 : index
    %c0_15 = arith.constant 0 : index
    %48 = vector.load %arg4[%c1_14, %c0_15] : memref<3x256xbf16, #tpu.memory_space<vmem>>, vector<1x256xbf16>
    %49 = vector.shape_cast %48 : vector<1x256xbf16> to vector<256xbf16>
    %50 = vector.shape_cast %49 : vector<256xbf16> to vector<1x256xbf16>
    %51 = vector.broadcast %50 : vector<1x256xbf16> to vector<4x256xbf16>
    %52 = arith.mulf %47, %51 : vector<4x256xbf16>
    %53 = vector.extract_strided_slice %4 {offsets = [0, 145], sizes = [4, 256], strides = [1, 1]} : vector<4x512xbf16> to vector<4x256xbf16>
    %c2_16 = arith.constant 2 : index
    %c0_17 = arith.constant 0 : index
    %54 = vector.load %arg4[%c2_16, %c0_17] : memref<3x256xbf16, #tpu.memory_space<vmem>>, vector<1x256xbf16>
    %55 = vector.shape_cast %54 : vector<1x256xbf16> to vector<256xbf16>
    %56 = vector.shape_cast %55 : vector<256xbf16> to vector<1x256xbf16>
    %57 = vector.broadcast %56 : vector<1x256xbf16> to vector<4x256xbf16>
    %58 = arith.mulf %53, %57 : vector<4x256xbf16>
    %59 = tpu.concatenate %10, %16, %22, %28, %34, %40, %46, %52, %58 in 0 : vector<4x256xbf16>, vector<4x256xbf16>, vector<4x256xbf16>, vector<4x256xbf16>, vector<4x256xbf16>, vector<4x256xbf16>, vector<4x256xbf16>, vector<4x256xbf16>, vector<4x256xbf16> -> vector<36x256xbf16>
    %c0_18 = arith.constant 0 : index
    %c0_19 = arith.constant 0 : index
    %60 = vector.load %arg2[%c0_18, %c0_19] : memref<8x36xbf16, #tpu.memory_space<vmem>>, vector<8x36xbf16>
    %cst_20 = arith.constant dense<0.000000e+00> : vector<8x256xf32>
    %61 = tpu.matmul %60, %59, %cst_20 {dimension_numbers = #tpu.dot_dimension_numbers<[1], [0], [0], [1], [0, 0, 1, 1], [], []>} : vector<8x36xbf16>, vector<36x256xbf16>, vector<8x256xf32> -> vector<8x256xf32>
    %c0_21 = arith.constant 0 : index
    %c0_22 = arith.constant 0 : index
    %62 = vector.load %arg3[%c0_21, %c0_22] : memref<8x1xf32, #tpu.memory_space<vmem>>, vector<8x1xf32>
    %63 = vector.broadcast %62 : vector<8x1xf32> to vector<8x256xf32>
    %64 = arith.addf %61, %63 : vector<8x256xf32>
    %65 = arith.truncf %64 : vector<8x256xf32> to vector<8x256xbf16>
    %c0_23 = arith.constant 0 : index
    %c0_24 = arith.constant 0 : index
    %c0_25 = arith.constant 0 : index
    %66 = vector.load %arg5[%c0_23, %c0_24, %c0_25] : memref<1x8x256xbf16, #tpu.memory_space<vmem>>, vector<1x8x256xbf16>
    %67 = vector.shape_cast %66 : vector<1x8x256xbf16> to vector<8x256xbf16>
    %68 = vector.shape_cast %65 : vector<8x256xbf16> to vector<1x8x256xbf16>
    tpu.vector_store %arg5[%c0_23, %c0_24, %c0_25], %68 {strides = array<i32>} : memref<1x8x256xbf16, #tpu.memory_space<vmem>>, vector<1x8x256xbf16>,
    %69 = arith.extf %65 : vector<8x256xbf16> to vector<8x256xf32>
    %cst_26 = arith.constant dense<0.000000e+00> : vector<8xf32>
    %70 = vector.multi_reduction <add>, %69, %cst_26 [1] : vector<8x256xf32> to vector<8xf32>
    %71 = vector.shape_cast %70 : vector<8xf32> to vector<8x1xf32>
    %c0_27 = arith.constant 0 : index
    %c0_28 = arith.constant 0 : index
    %c0_29 = arith.constant 0 : index
    %72 = vector.load %arg6[%c0_27, %c0_28, %c0_29] : memref<1x8x1xf32, #tpu.memory_space<vmem>>, vector<1x8x1xf32>
    %73 = vector.shape_cast %72 : vector<1x8x1xf32> to vector<8x1xf32>
    %74 = vector.shape_cast %71 : vector<8x1xf32> to vector<1x8x1xf32>
    tpu.vector_store %arg6[%c0_27, %c0_28, %c0_29], %74 {strides = array<i32>} : memref<1x8x1xf32, #tpu.memory_space<vmem>>, vector<1x8x1xf32>,
    %75 = arith.mulf %69, %69 : vector<8x256xf32>
    %cst_30 = arith.constant dense<0.000000e+00> : vector<8xf32>
    %76 = vector.multi_reduction <add>, %75, %cst_30 [1] : vector<8x256xf32> to vector<8xf32>
    %77 = vector.shape_cast %76 : vector<8xf32> to vector<8x1xf32>
    %c0_31 = arith.constant 0 : index
    %c0_32 = arith.constant 0 : index
    %c0_33 = arith.constant 0 : index
    %78 = vector.load %arg7[%c0_31, %c0_32, %c0_33] : memref<1x8x1xf32, #tpu.memory_space<vmem>>, vector<1x8x1xf32>
    %79 = vector.shape_cast %78 : vector<1x8x1xf32> to vector<8x1xf32>
    %80 = vector.shape_cast %77 : vector<8x1xf32> to vector<1x8x1xf32>
    tpu.vector_store %arg7[%c0_31, %c0_32, %c0_33], %80 {strides = array<i32>} : memref<1x8x1xf32, #tpu.memory_space<vmem>>, vector<1x8x1xf32>,
    return
  }
  func.func @transform_0(%arg0: i32) -> (i32, i32, i32) {
    %c0_i32 = arith.constant 0 : i32
    %c0_i32_0 = arith.constant 0 : i32
    %c0_i32_1 = arith.constant 0 : i32
    return %arg0, %c0_i32, %c0_i32_0 : i32, i32, i32
  }
  func.func @transform_1(%arg0: i32) -> (i32, i32) {
    %c0_i32 = arith.constant 0 : i32
    %c0_i32_0 = arith.constant 0 : i32
    %c0_i32_1 = arith.constant 0 : i32
    return %c0_i32, %c0_i32_0 : i32, i32
  }
  func.func @transform_2(%arg0: i32) -> (i32, i32) {
    %c0_i32 = arith.constant 0 : i32
    %c0_i32_0 = arith.constant 0 : i32
    %c0_i32_1 = arith.constant 0 : i32
    return %c0_i32, %c0_i32_0 : i32, i32
  }
  func.func @transform_3(%arg0: i32) -> (i32, i32) {
    %c0_i32 = arith.constant 0 : i32
    %c0_i32_0 = arith.constant 0 : i32
    %c0_i32_1 = arith.constant 0 : i32
    return %c0_i32, %c0_i32_0 : i32, i32
  }
  func.func @transform_4(%arg0: i32) -> (i32, i32, i32) {
    %c0_i32 = arith.constant 0 : i32
    %c0_i32_0 = arith.constant 0 : i32
    %c0_i32_1 = arith.constant 0 : i32
    return %arg0, %c0_i32, %c0_i32_0 : i32, i32, i32
  }
  func.func @transform_5(%arg0: i32) -> (i32, i32, i32) {
    %c0_i32 = arith.constant 0 : i32
    %c0_i32_0 = arith.constant 0 : i32
    %c0_i32_1 = arith.constant 0 : i32
    return %arg0, %c0_i32, %c0_i32_0 : i32, i32, i32
  }
  func.func @transform_6(%arg0: i32) -> (i32, i32, i32) {
    %c0_i32 = arith.constant 0 : i32
    %c0_i32_0 = arith.constant 0 : i32
    %c0_i32_1 = arith.constant 0 : i32
    return %arg0, %c0_i32, %c0_i32_0 : i32, i32, i32
  }
}

module attributes {stable_mosaic.version = 11 : i64} {
  func.func @_bn_relu_kernel(%arg0: i32, %arg1: memref<1x8x256xbf16, #tpu.memory_space<vmem>>, %arg2: memref<8x1xf32, #tpu.memory_space<vmem>>, %arg3: memref<8x1xf32, #tpu.memory_space<vmem>>, %arg4: memref<1x8x256xf32, #tpu.memory_space<vmem>>) attributes {dimension_semantics = [#tpu.dimension_semantics<parallel>], iteration_bounds = array<i64: 2>, scalar_prefetch = 0 : i64, scratch_operands = 0 : i64, tpu.core_type = #tpu.core_type<tc>, window_params = [{transform_indices = @transform_0, window_bounds = array<i64: 1, 8, 256>}, {pipeline_mode = #tpu.pipeline_mode<synchronous>, transform_indices = @transform_1, window_bounds = array<i64: 8, 1>}, {pipeline_mode = #tpu.pipeline_mode<synchronous>, transform_indices = @transform_2, window_bounds = array<i64: 8, 1>}, {transform_indices = @transform_3, window_bounds = array<i64: 1, 8, 256>}]} {
    %c0 = arith.constant 0 : index
    %c0_0 = arith.constant 0 : index
    %c0_1 = arith.constant 0 : index
    %0 = vector.load %arg1[%c0, %c0_0, %c0_1] : memref<1x8x256xbf16, #tpu.memory_space<vmem>>, vector<1x8x256xbf16>
    %1 = vector.shape_cast %0 : vector<1x8x256xbf16> to vector<8x256xbf16>
    %2 = arith.extf %1 : vector<8x256xbf16> to vector<8x256xf32>
    %c0_2 = arith.constant 0 : index
    %c0_3 = arith.constant 0 : index
    %3 = vector.load %arg2[%c0_2, %c0_3] : memref<8x1xf32, #tpu.memory_space<vmem>>, vector<8x1xf32>
    %4 = vector.broadcast %3 : vector<8x1xf32> to vector<8x256xf32>
    %5 = arith.mulf %2, %4 : vector<8x256xf32>
    %c0_4 = arith.constant 0 : index
    %c0_5 = arith.constant 0 : index
    %6 = vector.load %arg3[%c0_4, %c0_5] : memref<8x1xf32, #tpu.memory_space<vmem>>, vector<8x1xf32>
    %7 = vector.broadcast %6 : vector<8x1xf32> to vector<8x256xf32>
    %8 = arith.addf %5, %7 : vector<8x256xf32>
    %cst = arith.constant 0.000000e+00 : f32
    %9 = vector.broadcast %cst : f32 to vector<8x256xf32>
    %10 = arith.maximumf %8, %9 : vector<8x256xf32>
    %c0_6 = arith.constant 0 : index
    %c0_7 = arith.constant 0 : index
    %c0_8 = arith.constant 0 : index
    %11 = vector.load %arg4[%c0_6, %c0_7, %c0_8] : memref<1x8x256xf32, #tpu.memory_space<vmem>>, vector<1x8x256xf32>
    %12 = vector.shape_cast %11 : vector<1x8x256xf32> to vector<8x256xf32>
    %13 = vector.shape_cast %10 : vector<8x256xf32> to vector<1x8x256xf32>
    tpu.vector_store %arg4[%c0_6, %c0_7, %c0_8], %13 {strides = array<i32>} : memref<1x8x256xf32, #tpu.memory_space<vmem>>, vector<1x8x256xf32>,
    return
  }
  func.func @transform_0(%arg0: i32) -> (i32, i32, i32) {
    %c0_i32 = arith.constant 0 : i32
    %c0_i32_0 = arith.constant 0 : i32
    %c0_i32_1 = arith.constant 0 : i32
    return %arg0, %c0_i32, %c0_i32_0 : i32, i32, i32
  }
  func.func @transform_1(%arg0: i32) -> (i32, i32) {
    %c0_i32 = arith.constant 0 : i32
    %c0_i32_0 = arith.constant 0 : i32
    %c0_i32_1 = arith.constant 0 : i32
    return %c0_i32, %c0_i32_0 : i32, i32
  }
  func.func @transform_2(%arg0: i32) -> (i32, i32) {
    %c0_i32 = arith.constant 0 : i32
    %c0_i32_0 = arith.constant 0 : i32
    %c0_i32_1 = arith.constant 0 : i32
    return %c0_i32, %c0_i32_0 : i32, i32
  }
  func.func @transform_3(%arg0: i32) -> (i32, i32, i32) {
    %c0_i32 = arith.constant 0 : i32
    %c0_i32_0 = arith.constant 0 : i32
    %c0_i32_1 = arith.constant 0 : i32
    return %arg0, %c0_i32, %c0_i32_0 : i32, i32, i32
  }
}

module attributes {stable_mosaic.version = 11 : i64} {
  func.func @kernel(%arg0: i32, %arg1: memref<1x8x256xbf16, #tpu.memory_space<vmem>>, %arg2: memref<8x72xbf16, #tpu.memory_space<vmem>>, %arg3: memref<8x1xf32, #tpu.memory_space<vmem>>, %arg4: memref<3x256xbf16, #tpu.memory_space<vmem>>, %arg5: memref<8x1xf32, #tpu.memory_space<vmem>>, %arg6: memref<8x1xf32, #tpu.memory_space<vmem>>, %arg7: memref<1x8x256xbf16, #tpu.memory_space<vmem>>, %arg8: memref<1x8x1xf32, #tpu.memory_space<vmem>>, %arg9: memref<1x8x1xf32, #tpu.memory_space<vmem>>) attributes {dimension_semantics = [#tpu.dimension_semantics<parallel>], iteration_bounds = array<i64: 2>, scalar_prefetch = 0 : i64, scratch_operands = 0 : i64, tpu.core_type = #tpu.core_type<tc>, window_params = [{transform_indices = @transform_0, window_bounds = array<i64: 1, 8, 256>}, {pipeline_mode = #tpu.pipeline_mode<synchronous>, transform_indices = @transform_1, window_bounds = array<i64: 8, 72>}, {pipeline_mode = #tpu.pipeline_mode<synchronous>, transform_indices = @transform_2, window_bounds = array<i64: 8, 1>}, {pipeline_mode = #tpu.pipeline_mode<synchronous>, transform_indices = @transform_3, window_bounds = array<i64: 3, 256>}, {pipeline_mode = #tpu.pipeline_mode<synchronous>, transform_indices = @transform_4, window_bounds = array<i64: 8, 1>}, {pipeline_mode = #tpu.pipeline_mode<synchronous>, transform_indices = @transform_5, window_bounds = array<i64: 8, 1>}, {transform_indices = @transform_6, window_bounds = array<i64: 1, 8, 256>}, {transform_indices = @transform_7, window_bounds = array<i64: 1, 8, 1>}, {transform_indices = @transform_8, window_bounds = array<i64: 1, 8, 1>}]} {
    %c0 = arith.constant 0 : index
    %c0_0 = arith.constant 0 : index
    %c0_1 = arith.constant 0 : index
    %0 = vector.load %arg1[%c0, %c0_0, %c0_1] : memref<1x8x256xbf16, #tpu.memory_space<vmem>>, vector<1x8x256xbf16>
    %1 = vector.shape_cast %0 : vector<1x8x256xbf16> to vector<8x256xbf16>
    %2 = arith.extf %1 : vector<8x256xbf16> to vector<8x256xf32>
    %c0_2 = arith.constant 0 : index
    %c0_3 = arith.constant 0 : index
    %3 = vector.load %arg5[%c0_2, %c0_3] : memref<8x1xf32, #tpu.memory_space<vmem>>, vector<8x1xf32>
    %4 = vector.broadcast %3 : vector<8x1xf32> to vector<8x256xf32>
    %5 = arith.mulf %2, %4 : vector<8x256xf32>
    %c0_4 = arith.constant 0 : index
    %c0_5 = arith.constant 0 : index
    %6 = vector.load %arg6[%c0_4, %c0_5] : memref<8x1xf32, #tpu.memory_space<vmem>>, vector<8x1xf32>
    %7 = vector.broadcast %6 : vector<8x1xf32> to vector<8x256xf32>
    %8 = arith.addf %5, %7 : vector<8x256xf32>
    %cst = arith.constant 0.000000e+00 : f32
    %9 = vector.broadcast %cst : f32 to vector<8x256xf32>
    %10 = arith.maximumf %8, %9 : vector<8x256xf32>
    %11 = arith.truncf %10 : vector<8x256xf32> to vector<8x256xbf16>
    %cst_6 = arith.constant 0.000000e+00 : bf16
    %12 = vector.broadcast %cst_6 : bf16 to vector<8x128xbf16>
    %13 = tpu.concatenate %12, %11, %12 in 1 : vector<8x128xbf16>, vector<8x256xbf16>, vector<8x128xbf16> -> vector<8x512xbf16>
    %14 = vector.extract_strided_slice %13 {offsets = [0, 111], sizes = [8, 256], strides = [1, 1]} : vector<8x512xbf16> to vector<8x256xbf16>
    %c0_7 = arith.constant 0 : index
    %c0_8 = arith.constant 0 : index
    %15 = vector.load %arg4[%c0_7, %c0_8] : memref<3x256xbf16, #tpu.memory_space<vmem>>, vector<1x256xbf16>
    %16 = vector.shape_cast %15 : vector<1x256xbf16> to vector<256xbf16>
    %17 = vector.shape_cast %16 : vector<256xbf16> to vector<1x256xbf16>
    %18 = vector.broadcast %17 : vector<1x256xbf16> to vector<8x256xbf16>
    %19 = arith.mulf %14, %18 : vector<8x256xbf16>
    %20 = vector.extract_strided_slice %13 {offsets = [0, 112], sizes = [8, 256], strides = [1, 1]} : vector<8x512xbf16> to vector<8x256xbf16>
    %c1 = arith.constant 1 : index
    %c0_9 = arith.constant 0 : index
    %21 = vector.load %arg4[%c1, %c0_9] : memref<3x256xbf16, #tpu.memory_space<vmem>>, vector<1x256xbf16>
    %22 = vector.shape_cast %21 : vector<1x256xbf16> to vector<256xbf16>
    %23 = vector.shape_cast %22 : vector<256xbf16> to vector<1x256xbf16>
    %24 = vector.broadcast %23 : vector<1x256xbf16> to vector<8x256xbf16>
    %25 = arith.mulf %20, %24 : vector<8x256xbf16>
    %26 = vector.extract_strided_slice %13 {offsets = [0, 113], sizes = [8, 256], strides = [1, 1]} : vector<8x512xbf16> to vector<8x256xbf16>
    %c2 = arith.constant 2 : index
    %c0_10 = arith.constant 0 : index
    %27 = vector.load %arg4[%c2, %c0_10] : memref<3x256xbf16, #tpu.memory_space<vmem>>, vector<1x256xbf16>
    %28 = vector.shape_cast %27 : vector<1x256xbf16> to vector<256xbf16>
    %29 = vector.shape_cast %28 : vector<256xbf16> to vector<1x256xbf16>
    %30 = vector.broadcast %29 : vector<1x256xbf16> to vector<8x256xbf16>
    %31 = arith.mulf %26, %30 : vector<8x256xbf16>
    %32 = vector.extract_strided_slice %13 {offsets = [0, 127], sizes = [8, 256], strides = [1, 1]} : vector<8x512xbf16> to vector<8x256xbf16>
    %c0_11 = arith.constant 0 : index
    %c0_12 = arith.constant 0 : index
    %33 = vector.load %arg4[%c0_11, %c0_12] : memref<3x256xbf16, #tpu.memory_space<vmem>>, vector<1x256xbf16>
    %34 = vector.shape_cast %33 : vector<1x256xbf16> to vector<256xbf16>
    %35 = vector.shape_cast %34 : vector<256xbf16> to vector<1x256xbf16>
    %36 = vector.broadcast %35 : vector<1x256xbf16> to vector<8x256xbf16>
    %37 = arith.mulf %32, %36 : vector<8x256xbf16>
    %38 = vector.extract_strided_slice %13 {offsets = [0, 128], sizes = [8, 256], strides = [1, 1]} : vector<8x512xbf16> to vector<8x256xbf16>
    %c1_13 = arith.constant 1 : index
    %c0_14 = arith.constant 0 : index
    %39 = vector.load %arg4[%c1_13, %c0_14] : memref<3x256xbf16, #tpu.memory_space<vmem>>, vector<1x256xbf16>
    %40 = vector.shape_cast %39 : vector<1x256xbf16> to vector<256xbf16>
    %41 = vector.shape_cast %40 : vector<256xbf16> to vector<1x256xbf16>
    %42 = vector.broadcast %41 : vector<1x256xbf16> to vector<8x256xbf16>
    %43 = arith.mulf %38, %42 : vector<8x256xbf16>
    %44 = vector.extract_strided_slice %13 {offsets = [0, 129], sizes = [8, 256], strides = [1, 1]} : vector<8x512xbf16> to vector<8x256xbf16>
    %c2_15 = arith.constant 2 : index
    %c0_16 = arith.constant 0 : index
    %45 = vector.load %arg4[%c2_15, %c0_16] : memref<3x256xbf16, #tpu.memory_space<vmem>>, vector<1x256xbf16>
    %46 = vector.shape_cast %45 : vector<1x256xbf16> to vector<256xbf16>
    %47 = vector.shape_cast %46 : vector<256xbf16> to vector<1x256xbf16>
    %48 = vector.broadcast %47 : vector<1x256xbf16> to vector<8x256xbf16>
    %49 = arith.mulf %44, %48 : vector<8x256xbf16>
    %50 = vector.extract_strided_slice %13 {offsets = [0, 143], sizes = [8, 256], strides = [1, 1]} : vector<8x512xbf16> to vector<8x256xbf16>
    %c0_17 = arith.constant 0 : index
    %c0_18 = arith.constant 0 : index
    %51 = vector.load %arg4[%c0_17, %c0_18] : memref<3x256xbf16, #tpu.memory_space<vmem>>, vector<1x256xbf16>
    %52 = vector.shape_cast %51 : vector<1x256xbf16> to vector<256xbf16>
    %53 = vector.shape_cast %52 : vector<256xbf16> to vector<1x256xbf16>
    %54 = vector.broadcast %53 : vector<1x256xbf16> to vector<8x256xbf16>
    %55 = arith.mulf %50, %54 : vector<8x256xbf16>
    %56 = vector.extract_strided_slice %13 {offsets = [0, 144], sizes = [8, 256], strides = [1, 1]} : vector<8x512xbf16> to vector<8x256xbf16>
    %c1_19 = arith.constant 1 : index
    %c0_20 = arith.constant 0 : index
    %57 = vector.load %arg4[%c1_19, %c0_20] : memref<3x256xbf16, #tpu.memory_space<vmem>>, vector<1x256xbf16>
    %58 = vector.shape_cast %57 : vector<1x256xbf16> to vector<256xbf16>
    %59 = vector.shape_cast %58 : vector<256xbf16> to vector<1x256xbf16>
    %60 = vector.broadcast %59 : vector<1x256xbf16> to vector<8x256xbf16>
    %61 = arith.mulf %56, %60 : vector<8x256xbf16>
    %62 = vector.extract_strided_slice %13 {offsets = [0, 145], sizes = [8, 256], strides = [1, 1]} : vector<8x512xbf16> to vector<8x256xbf16>
    %c2_21 = arith.constant 2 : index
    %c0_22 = arith.constant 0 : index
    %63 = vector.load %arg4[%c2_21, %c0_22] : memref<3x256xbf16, #tpu.memory_space<vmem>>, vector<1x256xbf16>
    %64 = vector.shape_cast %63 : vector<1x256xbf16> to vector<256xbf16>
    %65 = vector.shape_cast %64 : vector<256xbf16> to vector<1x256xbf16>
    %66 = vector.broadcast %65 : vector<1x256xbf16> to vector<8x256xbf16>
    %67 = arith.mulf %62, %66 : vector<8x256xbf16>
    %68 = tpu.concatenate %19, %25, %31, %37, %43, %49, %55, %61, %67 in 0 : vector<8x256xbf16>, vector<8x256xbf16>, vector<8x256xbf16>, vector<8x256xbf16>, vector<8x256xbf16>, vector<8x256xbf16>, vector<8x256xbf16>, vector<8x256xbf16>, vector<8x256xbf16> -> vector<72x256xbf16>
    %c0_23 = arith.constant 0 : index
    %c0_24 = arith.constant 0 : index
    %69 = vector.load %arg2[%c0_23, %c0_24] : memref<8x72xbf16, #tpu.memory_space<vmem>>, vector<8x72xbf16>
    %cst_25 = arith.constant dense<0.000000e+00> : vector<8x256xf32>
    %70 = tpu.matmul %69, %68, %cst_25 {dimension_numbers = #tpu.dot_dimension_numbers<[1], [0], [0], [1], [0, 0, 1, 1], [], []>} : vector<8x72xbf16>, vector<72x256xbf16>, vector<8x256xf32> -> vector<8x256xf32>
    %c0_26 = arith.constant 0 : index
    %c0_27 = arith.constant 0 : index
    %71 = vector.load %arg3[%c0_26, %c0_27] : memref<8x1xf32, #tpu.memory_space<vmem>>, vector<8x1xf32>
    %72 = vector.broadcast %71 : vector<8x1xf32> to vector<8x256xf32>
    %73 = arith.addf %70, %72 : vector<8x256xf32>
    %74 = arith.truncf %73 : vector<8x256xf32> to vector<8x256xbf16>
    %c0_28 = arith.constant 0 : index
    %c0_29 = arith.constant 0 : index
    %c0_30 = arith.constant 0 : index
    %75 = vector.load %arg7[%c0_28, %c0_29, %c0_30] : memref<1x8x256xbf16, #tpu.memory_space<vmem>>, vector<1x8x256xbf16>
    %76 = vector.shape_cast %75 : vector<1x8x256xbf16> to vector<8x256xbf16>
    %77 = vector.shape_cast %74 : vector<8x256xbf16> to vector<1x8x256xbf16>
    tpu.vector_store %arg7[%c0_28, %c0_29, %c0_30], %77 {strides = array<i32>} : memref<1x8x256xbf16, #tpu.memory_space<vmem>>, vector<1x8x256xbf16>,
    %78 = arith.extf %74 : vector<8x256xbf16> to vector<8x256xf32>
    %cst_31 = arith.constant dense<0.000000e+00> : vector<8xf32>
    %79 = vector.multi_reduction <add>, %78, %cst_31 [1] : vector<8x256xf32> to vector<8xf32>
    %80 = vector.shape_cast %79 : vector<8xf32> to vector<8x1xf32>
    %c0_32 = arith.constant 0 : index
    %c0_33 = arith.constant 0 : index
    %c0_34 = arith.constant 0 : index
    %81 = vector.load %arg8[%c0_32, %c0_33, %c0_34] : memref<1x8x1xf32, #tpu.memory_space<vmem>>, vector<1x8x1xf32>
    %82 = vector.shape_cast %81 : vector<1x8x1xf32> to vector<8x1xf32>
    %83 = vector.shape_cast %80 : vector<8x1xf32> to vector<1x8x1xf32>
    tpu.vector_store %arg8[%c0_32, %c0_33, %c0_34], %83 {strides = array<i32>} : memref<1x8x1xf32, #tpu.memory_space<vmem>>, vector<1x8x1xf32>,
    %84 = arith.mulf %78, %78 : vector<8x256xf32>
    %cst_35 = arith.constant dense<0.000000e+00> : vector<8xf32>
    %85 = vector.multi_reduction <add>, %84, %cst_35 [1] : vector<8x256xf32> to vector<8xf32>
    %86 = vector.shape_cast %85 : vector<8xf32> to vector<8x1xf32>
    %c0_36 = arith.constant 0 : index
    %c0_37 = arith.constant 0 : index
    %c0_38 = arith.constant 0 : index
    %87 = vector.load %arg9[%c0_36, %c0_37, %c0_38] : memref<1x8x1xf32, #tpu.memory_space<vmem>>, vector<1x8x1xf32>
    %88 = vector.shape_cast %87 : vector<1x8x1xf32> to vector<8x1xf32>
    %89 = vector.shape_cast %86 : vector<8x1xf32> to vector<1x8x1xf32>
    tpu.vector_store %arg9[%c0_36, %c0_37, %c0_38], %89 {strides = array<i32>} : memref<1x8x1xf32, #tpu.memory_space<vmem>>, vector<1x8x1xf32>,
    return
  }
  func.func @transform_0(%arg0: i32) -> (i32, i32, i32) {
    %c0_i32 = arith.constant 0 : i32
    %c0_i32_0 = arith.constant 0 : i32
    %c0_i32_1 = arith.constant 0 : i32
    return %arg0, %c0_i32, %c0_i32_0 : i32, i32, i32
  }
  func.func @transform_1(%arg0: i32) -> (i32, i32) {
    %c0_i32 = arith.constant 0 : i32
    %c0_i32_0 = arith.constant 0 : i32
    %c0_i32_1 = arith.constant 0 : i32
    return %c0_i32, %c0_i32_0 : i32, i32
  }
  func.func @transform_2(%arg0: i32) -> (i32, i32) {
    %c0_i32 = arith.constant 0 : i32
    %c0_i32_0 = arith.constant 0 : i32
    %c0_i32_1 = arith.constant 0 : i32
    return %c0_i32, %c0_i32_0 : i32, i32
  }
  func.func @transform_3(%arg0: i32) -> (i32, i32) {
    %c0_i32 = arith.constant 0 : i32
    %c0_i32_0 = arith.constant 0 : i32
    %c0_i32_1 = arith.constant 0 : i32
    return %c0_i32, %c0_i32_0 : i32, i32
  }
  func.func @transform_4(%arg0: i32) -> (i32, i32) {
    %c0_i32 = arith.constant 0 : i32
    %c0_i32_0 = arith.constant 0 : i32
    %c0_i32_1 = arith.constant 0 : i32
    return %c0_i32, %c0_i32_0 : i32, i32
  }
  func.func @transform_5(%arg0: i32) -> (i32, i32) {
    %c0_i32 = arith.constant 0 : i32
    %c0_i32_0 = arith.constant 0 : i32
    %c0_i32_1 = arith.constant 0 : i32
    return %c0_i32, %c0_i32_0 : i32, i32
  }
  func.func @transform_6(%arg0: i32) -> (i32, i32, i32) {
    %c0_i32 = arith.constant 0 : i32
    %c0_i32_0 = arith.constant 0 : i32
    %c0_i32_1 = arith.constant 0 : i32
    return %arg0, %c0_i32, %c0_i32_0 : i32, i32, i32
  }
  func.func @transform_7(%arg0: i32) -> (i32, i32, i32) {
    %c0_i32 = arith.constant 0 : i32
    %c0_i32_0 = arith.constant 0 : i32
    %c0_i32_1 = arith.constant 0 : i32
    return %arg0, %c0_i32, %c0_i32_0 : i32, i32, i32
  }
  func.func @transform_8(%arg0: i32) -> (i32, i32, i32) {
    %c0_i32 = arith.constant 0 : i32
    %c0_i32_0 = arith.constant 0 : i32
    %c0_i32_1 = arith.constant 0 : i32
    return %arg0, %c0_i32, %c0_i32_0 : i32, i32, i32
  }
}

</mosaic_0001>

<llo_original>
// kernel: double_conv.5
$region0: #{double_conv.5}
  #allocation0 [shape = 'u32[]', space=smem, size = 0x4, offset = 0x4, fixed_abs, tag = 'smem constant byte address 0x4 - core index']
  #allocation1 [shape = 'u32[144,128]{1,0:T(1,128)}', space=vmem, size = 0x12000, scoped, tag = 'internal scratch']
  %s0 = inlined_call_operand.vmem [shape: bf16[2,8,256], index: 0, kind: input, shape index: {}]
  %s1 = inlined_call_operand.vmem [shape: f32[8,1], index: 1, kind: input, shape index: {}]
  %s2 = inlined_call_operand.vmem [shape: f32[8,1], index: 2, kind: input, shape index: {}]
  %s3 = inlined_call_operand.vmem [shape: f32[2,8,256], index: 3, kind: output, shape index: {}]
  %s4 = sld [smem:[#allocation0]]
  $region45: #{double_conv.5} parent=0
    _
  %s6 = ssub.s32 1, %s4
  %s7 = scalar_select 0, %s6, %s4
  loop: start=0, step=1, limit=4
  $region2: #{double_conv.5} parent=0 // loop_pre_header
    _
  $region3: #{double_conv.5} parent=0 // loop_header
    %s9 = sphi 0, %s13
    %p10 = scmp.ge.s32.totalorder %s9, 4
    %s19 = sphi 0, %s21
    %s22 = sphi 0, %s19
    %s23 = sphi 0, %s22
    %s39 = sphi 0, %s23
    %s43 = sphi 0, %s43
    %s45 = sphi 0, %s43
    %s46 = sphi 0, %s45
    %s60 = sphi 0, %s46
    %s64 = sphi 0, %s64
    %s66 = sphi 0, %s64
    %s67 = sphi 0, %s66
    %s81 = sphi 0, %s67
    %s87 = sphi 0, %s89
    %s90 = sphi 0, %s87
    %s91 = sphi 0, %s90
    %s107 = sphi 0, %s91
  $region4: #{double_conv.5} parent=0 // loop_header_branch
    %12 = sbr.rel (%p10) target = $region8
  $region5: #{double_conv.5} parent=0 // loop_body
    %s14 = ssub.s32 %s9, 1
    %s15 = ssub.s32 %s9, 2
    %s16 = sadd.s32 %s9, 1
    %s17 = ssub.s32 %s9, %s16
    %p18 = scmp.eq.s32.totalorder %s17, 0
    %s20 = sadd.s32 %s19, 1
    %s21 = scalar_select %p18, %s19, %s20
    %p24 = pneg %p18
    %p25 = scmp.eq.s32.totalorder %s9, 1
    %p26 = por %p24, %p25
    %p27 = scmp.ne.s32.totalorder %s19, %s22
    %p28 = scmp.eq.s32.totalorder %s9, 0
    %p29 = por %p27, %p28
    %p30 = scmp.ne.s32.totalorder %s19, %s22
    %p31 = scmp.eq.s32.totalorder %s14, 1
    %p32 = por %p30, %p31
    %p33 = scmp.ne.s32.totalorder %s22, %s23
    %p34 = scmp.eq.s32.totalorder %s14, 0
    %p35 = por %p33, %p34
    %p36 = scmp.ne.s32.totalorder %s22, %s23
    %p37 = scmp.eq.s32.totalorder %s15, 1
    %p38 = por %p36, %p37
    %p40 = scmp.ne.s32.totalorder %s23, %s39
    %p41 = scmp.eq.s32.totalorder %s15, 0
    %p42 = por %p40, %p41
    %s44 = sadd.s32 %s43, 1
    %p47 = scmp.eq.s32.totalorder %s9, 1
    %p48 = scmp.ne.s32.totalorder %s43, %s45
    %p49 = scmp.eq.s32.totalorder %s9, 0
    %p50 = por %p48, %p49
    %p51 = scmp.ne.s32.totalorder %s43, %s45
    %p52 = scmp.eq.s32.totalorder %s14, 1
    %p53 = por %p51, %p52
    %p54 = scmp.ne.s32.totalorder %s45, %s46
    %p55 = scmp.eq.s32.totalorder %s14, 0
    %p56 = por %p54, %p55
    %p57 = scmp.ne.s32.totalorder %s45, %s46
    %p58 = scmp.eq.s32.totalorder %s15, 1
    %p59 = por %p57, %p58
    %p61 = scmp.ne.s32.totalorder %s46, %s60
    %p62 = scmp.eq.s32.totalorder %s15, 0
    %p63 = por %p61, %p62
    %s65 = sadd.s32 %s64, 1
    %p68 = scmp.eq.s32.totalorder %s9, 1
    %p69 = scmp.ne.s32.totalorder %s64, %s66
    %p70 = scmp.eq.s32.totalorder %s9, 0
    %p71 = por %p69, %p70
    %p72 = scmp.ne.s32.totalorder %s64, %s66
    %p73 = scmp.eq.s32.totalorder %s14, 1
    %p74 = por %p72, %p73
    %p75 = scmp.ne.s32.totalorder %s66, %s67
    %p76 = scmp.eq.s32.totalorder %s14, 0
    %p77 = por %p75, %p76
    %p78 = scmp.ne.s32.totalorder %s66, %s67
    %p79 = scmp.eq.s32.totalorder %s15, 1
    %p80 = por %p78, %p79
    %p82 = scmp.ne.s32.totalorder %s67, %s81
    %p83 = scmp.eq.s32.totalorder %s15, 0
    %p84 = por %p82, %p83
    %s85 = ssub.s32 %s9, %s16
    %p86 = scmp.eq.s32.totalorder %s85, 0
    %s88 = sadd.s32 %s87, 1
    %s89 = scalar_select %p86, %s87, %s88
    %p92 = pneg %p86
    %p93 = scmp.eq.s32.totalorder %s9, 1
    %p94 = por %p92, %p93
    %p95 = scmp.ne.s32.totalorder %s87, %s90
    %p96 = scmp.eq.s32.totalorder %s9, 0
    %p97 = por %p95, %p96
    %p98 = scmp.ne.s32.totalorder %s87, %s90
    %p99 = scmp.eq.s32.totalorder %s14, 1
    %p100 = por %p98, %p99
    %p101 = scmp.ne.s32.totalorder %s90, %s91
    %p102 = scmp.eq.s32.totalorder %s14, 0
    %p103 = por %p101, %p102
    %p104 = scmp.ne.s32.totalorder %s90, %s91
    %p105 = scmp.eq.s32.totalorder %s15, 1
    %p106 = por %p104, %p105
    %p108 = scmp.ne.s32.totalorder %s91, %s107
    %p109 = scmp.eq.s32.totalorder %s15, 0
    %p110 = por %p108, %p109
    %p111 = scmp.le.s32.totalorder 1, %s9
    %p112 = scmp.lt.s32.totalorder %s9, 3
    %p113 = pnand %p111, %p112
    %p114 = pneg %p113
    // Predicated region
    $region9: #{double_conv.5} parent=5 // pred_check
      _
    $region10: #{double_conv.5} parent=5 // pred_check_branch
      %116 = sbr.rel (%p113) target = $region12
    $region11: #{double_conv.5} parent=5 // pred_region
      %s117 = ssub.s32 %s9, 1
      // Predicated region
      $region13: #{double_conv.5} parent=11 // pred_check
        %p118 = pneg %p56
      $region14: #{double_conv.5} parent=11 // pred_check_branch
        %120 = sbr.rel (%p118) target = $region16
      $region15: #{double_conv.5} parent=11 // pred_region
        _
      $region16: #{double_conv.5} parent=11 // pred_fallthru
        _
      // Predicated region
      $region17: #{double_conv.5} parent=11 // pred_check
        %p121 = pneg %p77
      $region18: #{double_conv.5} parent=11 // pred_check_branch
        %123 = sbr.rel (%p121) target = $region20
      $region19: #{double_conv.5} parent=11 // pred_region
        _
      $region20: #{double_conv.5} parent=11 // pred_fallthru
        _
    $region12: #{double_conv.5} parent=5 // pred_fallthru
      _
    %p124 = scmp.lt.s32.totalorder %s9, 2
    // Predicated region
    $region21: #{double_conv.5} parent=5 // pred_check
      %p125 = pneg %p124
    $region22: #{double_conv.5} parent=5 // pred_check_branch
      %127 = sbr.rel (%p125) target = $region24
    $region23: #{double_conv.5} parent=5 // pred_region
      // Predicated region
      $region25: #{double_conv.5} parent=23 // pred_check
        %p128 = pneg %p29
      $region26: #{double_conv.5} parent=23 // pred_check_branch
        %130 = sbr.rel (%p128) target = $region28
      $region27: #{double_conv.5} parent=23 // pred_region
        %p131 = scmp.lt.s32.totalorder %s9, 1
        %s132 = scalar_select %p131, %s9, 1
        %s133 = smul.addr %s132, 2
        %s134 = smul.addr %s133, 4
        %s135 = scalar_lea.vmem %s0, %s134
      $region28: #{double_conv.5} parent=23 // pred_fallthru
        _
    $region24: #{double_conv.5} parent=5 // pred_fallthru
      _
    %p136 = scmp.le.s32.totalorder 1, %s9
    %p137 = scmp.lt.s32.totalorder %s9, 3
    %p138 = pnand %p136, %p137
    %p139 = pneg %p138
    // Predicated region
    $region29: #{double_conv.5} parent=5 // pred_check
      _
    $region30: #{double_conv.5} parent=5 // pred_check_branch
      %141 = sbr.rel (%p138) target = $region32
    $region31: #{double_conv.5} parent=5 // pred_region
      %s142 = ssub.s32 %s9, 1
      %p143 = scmp.lt.s32.totalorder %s14, 1
      %s144 = scalar_select %p143, %s14, 1
      %s145 = smul.addr %s144, 2
      %s146 = smul.addr %s145, 4
      %s147 = scalar_lea.vmem %s0, %s146
      %p148 = pneg %p35
      %p149 = pneg %p32
      %p150 = pneg %p56
      %p151 = pneg %p53
      %p152 = pneg %p77
      %p153 = pneg %p74
      %p154 = pneg %p103
      %p155 = pneg %p100
      %p156 = scmp.lt.s32.totalorder %s14, 1
      %s157 = scalar_select %p156, %s14, 1
      %s158 = smul.addr %s157, 2
      %s159 = smul.addr %s158, 8
      %s160 = scalar_lea.vmem %s3, %s159
      %p161 = scmp.lt.s32.totalorder %s14, 1
      %s162 = scalar_select %p161, %s14, 1
      %s163 = smul.addr %s162, 2
      %s164 = smul.addr %s163, 4
      %s165 = scalar_lea.vmem %s0, %s164
      %p166 = scmp.lt.s32.totalorder %s14, 1
      %s167 = scalar_select %p166, %s14, 1
      %s168 = smul.addr %s167, 2
      %s169 = smul.addr %s168, 8
      %s170 = scalar_lea.vmem %s3, %s169
      %v171 = vld [vmem:[%s165] sm:$0xff]
      %v172 = vunpack.c.l.bf16 %v171
      %v173 = vunpack.c.h.bf16 %v171
      %v174 = vld [vmem:[%s1] sm:$0xff]
      %176 = vset.pattern.permute.xlu0 0
      %177 = vperm.xlu0 %176, %v174
      %v178 = vpop.permute.xlu0 %177
      %v180 = vmul.f32 %v172, %v178
      %v181 = vmul.f32 %v173, %v178
      %v182 = vld [vmem:[%s2] sm:$0xff]
      %184 = vset.pattern.permute.xlu0 0
      %185 = vperm.xlu0 %184, %v182
      %v186 = vpop.permute.xlu0 %185
      %v188 = vadd.f32 %v180, %v186
      %v189 = vadd.f32 %v181, %v186
      %v190 = vmax.f32 %v188, 0.0
      %v191 = vmax.f32 %v189, 0.0
      %192 = vst [vmem:[%s170] sm:$0xff] %v190
      %193 = vst [vmem:[%s170 + $0x8] sm:$0xff] %v191
      %p194 = scmp.lt.s32.totalorder %s14, 1
      %s195 = scalar_select %p194, %s14, 1
      %s196 = smul.addr %s195, 2
      %s197 = smul.addr %s196, 8
      %s198 = scalar_lea.vmem %s3, %s197
      // Predicated region
      $region33: #{double_conv.5} parent=31 // pred_check
        %p199 = pneg %p100
      $region34: #{double_conv.5} parent=31 // pred_check_branch
        %201 = sbr.rel (%p199) target = $region36
      $region35: #{double_conv.5} parent=31 // pred_region
        _
      $region36: #{double_conv.5} parent=31 // pred_fallthru
        _
    $region32: #{double_conv.5} parent=5 // pred_fallthru
      _
    %p202 = scmp.le.s32.totalorder 2, %s9
    // Predicated region
    $region37: #{double_conv.5} parent=5 // pred_check
      %p203 = pneg %p202
    $region38: #{double_conv.5} parent=5 // pred_check_branch
      %205 = sbr.rel (%p203) target = $region40
    $region39: #{double_conv.5} parent=5 // pred_region
      %s206 = ssub.s32 %s9, 2
      // Predicated region
      $region41: #{double_conv.5} parent=39 // pred_check
        %p207 = pneg %p106
      $region42: #{double_conv.5} parent=39 // pred_check_branch
        %209 = sbr.rel (%p207) target = $region44
      $region43: #{double_conv.5} parent=39 // pred_region
        %p210 = scmp.lt.s32.totalorder %s15, 1
        %s211 = scalar_select %p210, %s15, 1
        %s212 = smul.addr %s211, 2
        %s213 = smul.addr %s212, 8
        %s214 = scalar_lea.vmem %s3, %s213
      $region44: #{double_conv.5} parent=39 // pred_fallthru
        _
    $region40: #{double_conv.5} parent=5 // pred_fallthru
      _
  $region6: #{double_conv.5} parent=0 // loop_footer
    %s13 = sadd.s32 1, %s9
  $region7: #{double_conv.5} parent=0 // loop_footer_branch
    %8 = sbr.rel target = $region3
  $region8: #{double_conv.5} parent=0 // loop_exit
    _

// kernel: double_conv.3
$region0: #{double_conv.3}
  #allocation0 [shape = 'u32[]', space=smem, size = 0x4, offset = 0x4, fixed_abs, tag = 'smem constant byte address 0x4 - core index']
  #allocation1 [shape = 'u32[144,128]{1,0:T(1,128)}', space=vmem, size = 0x12000, scoped, tag = 'internal scratch']
  %s0 = inlined_call_operand.vmem [shape: f32[2,4,256], index: 0, kind: input, shape index: {}]
  %s1 = inlined_call_operand.vmem [shape: bf16[8,36], index: 1, kind: input, shape index: {}]
  %s2 = inlined_call_operand.vmem [shape: f32[8,1], index: 2, kind: input, shape index: {}]
  %s3 = inlined_call_operand.vmem [shape: bf16[3,256], index: 3, kind: input, shape index: {}]
  %s4 = inlined_call_operand.vmem [shape: bf16[2,8,256], index: 4, kind: output, shape index: {0}]
  %s5 = inlined_call_operand.vmem [shape: f32[2,8,1], index: 5, kind: output, shape index: {1}]
  %s6 = inlined_call_operand.vmem [shape: f32[2,8,1], index: 6, kind: output, shape index: {2}]
  %7 = xla_tuple %s4, %s5, %s6
  %s8 = sld [smem:[#allocation0]]
  $region65: #{double_conv.3} parent=0
    _
  %s10 = ssub.s32 1, %s8
  %s11 = scalar_select 0, %s10, %s8
  loop: start=0, step=1, limit=4
  $region2: #{double_conv.3} parent=0 // loop_pre_header
    _
  $region3: #{double_conv.3} parent=0 // loop_header
    %s13 = sphi 0, %s17
    %p14 = scmp.ge.s32.totalorder %s13, 4
    %s23 = sphi 0, %s25
    %s26 = sphi 0, %s23
    %s27 = sphi 0, %s26
    %s43 = sphi 0, %s27
    %s47 = sphi 0, %s47
    %s49 = sphi 0, %s47
    %s50 = sphi 0, %s49
    %s64 = sphi 0, %s50
    %s68 = sphi 0, %s68
    %s70 = sphi 0, %s68
    %s71 = sphi 0, %s70
    %s85 = sphi 0, %s71
    %s89 = sphi 0, %s89
    %s91 = sphi 0, %s89
    %s92 = sphi 0, %s91
    %s106 = sphi 0, %s92
    %s112 = sphi 0, %s114
    %s115 = sphi 0, %s112
    %s116 = sphi 0, %s115
    %s132 = sphi 0, %s116
    %s138 = sphi 0, %s140
    %s141 = sphi 0, %s138
    %s142 = sphi 0, %s141
    %s158 = sphi 0, %s142
    %s164 = sphi 0, %s166
    %s167 = sphi 0, %s164
    %s168 = sphi 0, %s167
    %s184 = sphi 0, %s168
  $region4: #{double_conv.3} parent=0 // loop_header_branch
    %16 = sbr.rel (%p14) target = $region8
  $region5: #{double_conv.3} parent=0 // loop_body
    %s18 = ssub.s32 %s13, 1
    %s19 = ssub.s32 %s13, 2
    %s20 = sadd.s32 %s13, 1
    %s21 = ssub.s32 %s13, %s20
    %p22 = scmp.eq.s32.totalorder %s21, 0
    %s24 = sadd.s32 %s23, 1
    %s25 = scalar_select %p22, %s23, %s24
    %p28 = pneg %p22
    %p29 = scmp.eq.s32.totalorder %s13, 1
    %p30 = por %p28, %p29
    %p31 = scmp.ne.s32.totalorder %s23, %s26
    %p32 = scmp.eq.s32.totalorder %s13, 0
    %p33 = por %p31, %p32
    %p34 = scmp.ne.s32.totalorder %s23, %s26
    %p35 = scmp.eq.s32.totalorder %s18, 1
    %p36 = por %p34, %p35
    %p37 = scmp.ne.s32.totalorder %s26, %s27
    %p38 = scmp.eq.s32.totalorder %s18, 0
    %p39 = por %p37, %p38
    %p40 = scmp.ne.s32.totalorder %s26, %s27
    %p41 = scmp.eq.s32.totalorder %s19, 1
    %p42 = por %p40, %p41
    %p44 = scmp.ne.s32.totalorder %s27, %s43
    %p45 = scmp.eq.s32.totalorder %s19, 0
    %p46 = por %p44, %p45
    %s48 = sadd.s32 %s47, 1
    %p51 = scmp.eq.s32.totalorder %s13, 1
    %p52 = scmp.ne.s32.totalorder %s47, %s49
    %p53 = scmp.eq.s32.totalorder %s13, 0
    %p54 = por %p52, %p53
    %p55 = scmp.ne.s32.totalorder %s47, %s49
    %p56 = scmp.eq.s32.totalorder %s18, 1
    %p57 = por %p55, %p56
    %p58 = scmp.ne.s32.totalorder %s49, %s50
    %p59 = scmp.eq.s32.totalorder %s18, 0
    %p60 = por %p58, %p59
    %p61 = scmp.ne.s32.totalorder %s49, %s50
    %p62 = scmp.eq.s32.totalorder %s19, 1
    %p63 = por %p61, %p62
    %p65 = scmp.ne.s32.totalorder %s50, %s64
    %p66 = scmp.eq.s32.totalorder %s19, 0
    %p67 = por %p65, %p66
    %s69 = sadd.s32 %s68, 1
    %p72 = scmp.eq.s32.totalorder %s13, 1
    %p73 = scmp.ne.s32.totalorder %s68, %s70
    %p74 = scmp.eq.s32.totalorder %s13, 0
    %p75 = por %p73, %p74
    %p76 = scmp.ne.s32.totalorder %s68, %s70
    %p77 = scmp.eq.s32.totalorder %s18, 1
    %p78 = por %p76, %p77
    %p79 = scmp.ne.s32.totalorder %s70, %s71
    %p80 = scmp.eq.s32.totalorder %s18, 0
    %p81 = por %p79, %p80
    %p82 = scmp.ne.s32.totalorder %s70, %s71
    %p83 = scmp.eq.s32.totalorder %s19, 1
    %p84 = por %p82, %p83
    %p86 = scmp.ne.s32.totalorder %s71, %s85
    %p87 = scmp.eq.s32.totalorder %s19, 0
    %p88 = por %p86, %p87
    %s90 = sadd.s32 %s89, 1
    %p93 = scmp.eq.s32.totalorder %s13, 1
    %p94 = scmp.ne.s32.totalorder %s89, %s91
    %p95 = scmp.eq.s32.totalorder %s13, 0
    %p96 = por %p94, %p95
    %p97 = scmp.ne.s32.totalorder %s89, %s91
    %p98 = scmp.eq.s32.totalorder %s18, 1
    %p99 = por %p97, %p98
    %p100 = scmp.ne.s32.totalorder %s91, %s92
    %p101 = scmp.eq.s32.totalorder %s18, 0
    %p102 = por %p100, %p101
    %p103 = scmp.ne.s32.totalorder %s91, %s92
    %p104 = scmp.eq.s32.totalorder %s19, 1
    %p105 = por %p103, %p104
    %p107 = scmp.ne.s32.totalorder %s92, %s106
    %p108 = scmp.eq.s32.totalorder %s19, 0
    %p109 = por %p107, %p108
    %s110 = ssub.s32 %s13, %s20
    %p111 = scmp.eq.s32.totalorder %s110, 0
    %s113 = sadd.s32 %s112, 1
    %s114 = scalar_select %p111, %s112, %s113
    %p117 = pneg %p111
    %p118 = scmp.eq.s32.totalorder %s13, 1
    %p119 = por %p117, %p118
    %p120 = scmp.ne.s32.totalorder %s112, %s115
    %p121 = scmp.eq.s32.totalorder %s13, 0
    %p122 = por %p120, %p121
    %p123 = scmp.ne.s32.totalorder %s112, %s115
    %p124 = scmp.eq.s32.totalorder %s18, 1
    %p125 = por %p123, %p124
    %p126 = scmp.ne.s32.totalorder %s115, %s116
    %p127 = scmp.eq.s32.totalorder %s18, 0
    %p128 = por %p126, %p127
    %p129 = scmp.ne.s32.totalorder %s115, %s116
    %p130 = scmp.eq.s32.totalorder %s19, 1
    %p131 = por %p129, %p130
    %p133 = scmp.ne.s32.totalorder %s116, %s132
    %p134 = scmp.eq.s32.totalorder %s19, 0
    %p135 = por %p133, %p134
    %s136 = ssub.s32 %s13, %s20
    %p137 = scmp.eq.s32.totalorder %s136, 0
    %s139 = sadd.s32 %s138, 1
    %s140 = scalar_select %p137, %s138, %s139
    %p143 = pneg %p137
    %p144 = scmp.eq.s32.totalorder %s13, 1
    %p145 = por %p143, %p144
    %p146 = scmp.ne.s32.totalorder %s138, %s141
    %p147 = scmp.eq.s32.totalorder %s13, 0
    %p148 = por %p146, %p147
    %p149 = scmp.ne.s32.totalorder %s138, %s141
    %p150 = scmp.eq.s32.totalorder %s18, 1
    %p151 = por %p149, %p150
    %p152 = scmp.ne.s32.totalorder %s141, %s142
    %p153 = scmp.eq.s32.totalorder %s18, 0
    %p154 = por %p152, %p153
    %p155 = scmp.ne.s32.totalorder %s141, %s142
    %p156 = scmp.eq.s32.totalorder %s19, 1
    %p157 = por %p155, %p156
    %p159 = scmp.ne.s32.totalorder %s142, %s158
    %p160 = scmp.eq.s32.totalorder %s19, 0
    %p161 = por %p159, %p160
    %s162 = ssub.s32 %s13, %s20
    %p163 = scmp.eq.s32.totalorder %s162, 0
    %s165 = sadd.s32 %s164, 1
    %s166 = scalar_select %p163, %s164, %s165
    %p169 = pneg %p163
    %p170 = scmp.eq.s32.totalorder %s13, 1
    %p171 = por %p169, %p170
    %p172 = scmp.ne.s32.totalorder %s164, %s167
    %p173 = scmp.eq.s32.totalorder %s13, 0
    %p174 = por %p172, %p173
    %p175 = scmp.ne.s32.totalorder %s164, %s167
    %p176 = scmp.eq.s32.totalorder %s18, 1
    %p177 = por %p175, %p176
    %p178 = scmp.ne.s32.totalorder %s167, %s168
    %p179 = scmp.eq.s32.totalorder %s18, 0
    %p180 = por %p178, %p179
    %p181 = scmp.ne.s32.totalorder %s167, %s168
    %p182 = scmp.eq.s32.totalorder %s19, 1
    %p183 = por %p181, %p182
    %p185 = scmp.ne.s32.totalorder %s168, %s184
    %p186 = scmp.eq.s32.totalorder %s19, 0
    %p187 = por %p185, %p186
    %p188 = scmp.le.s32.totalorder 1, %s13
    %p189 = scmp.lt.s32.totalorder %s13, 3
    %p190 = pnand %p188, %p189
    %p191 = pneg %p190
    // Predicated region
    $region9: #{double_conv.3} parent=5 // pred_check
      _
    $region10: #{double_conv.3} parent=5 // pred_check_branch
      %193 = sbr.rel (%p190) target = $region12
    $region11: #{double_conv.3} parent=5 // pred_region
      %s194 = ssub.s32 %s13, 1
      // Predicated region
      $region13: #{double_conv.3} parent=11 // pred_check
        %p195 = pneg %p60
      $region14: #{double_conv.3} parent=11 // pred_check_branch
        %197 = sbr.rel (%p195) target = $region16
      $region15: #{double_conv.3} parent=11 // pred_region
        _
      $region16: #{double_conv.3} parent=11 // pred_fallthru
        _
      // Predicated region
      $region17: #{double_conv.3} parent=11 // pred_check
        %p198 = pneg %p81
      $region18: #{double_conv.3} parent=11 // pred_check_branch
        %200 = sbr.rel (%p198) target = $region20
      $region19: #{double_conv.3} parent=11 // pred_region
        _
      $region20: #{double_conv.3} parent=11 // pred_fallthru
        _
      // Predicated region
      $region21: #{double_conv.3} parent=11 // pred_check
        %p201 = pneg %p102
      $region22: #{double_conv.3} parent=11 // pred_check_branch
        %203 = sbr.rel (%p201) target = $region24
      $region23: #{double_conv.3} parent=11 // pred_region
        _
      $region24: #{double_conv.3} parent=11 // pred_fallthru
        _
    $region12: #{double_conv.3} parent=5 // pred_fallthru
      _
    %p204 = scmp.lt.s32.totalorder %s13, 2
    // Predicated region
    $region25: #{double_conv.3} parent=5 // pred_check
      %p205 = pneg %p204
    $region26: #{double_conv.3} parent=5 // pred_check_branch
      %207 = sbr.rel (%p205) target = $region28
    $region27: #{double_conv.3} parent=5 // pred_region
      // Predicated region
      $region29: #{double_conv.3} parent=27 // pred_check
        %p208 = pneg %p33
      $region30: #{double_conv.3} parent=27 // pred_check_branch
        %210 = sbr.rel (%p208) target = $region32
      $region31: #{double_conv.3} parent=27 // pred_region
        %p211 = scmp.lt.s32.totalorder %s13, 1
        %s212 = scalar_select %p211, %s13, 1
        %s213 = smul.addr %s212, 2
        %s214 = smul.addr %s213, 4
        %s215 = scalar_lea.vmem %s0, %s214
      $region32: #{double_conv.3} parent=27 // pred_fallthru
        _
    $region28: #{double_conv.3} parent=5 // pred_fallthru
      _
    %p216 = scmp.le.s32.totalorder 1, %s13
    %p217 = scmp.lt.s32.totalorder %s13, 3
    %p218 = pnand %p216, %p217
    %p219 = pneg %p218
    // Predicated region
    $region33: #{double_conv.3} parent=5 // pred_check
      _
    $region34: #{double_conv.3} parent=5 // pred_check_branch
      %221 = sbr.rel (%p218) target = $region36
    $region35: #{double_conv.3} parent=5 // pred_region
      %s222 = ssub.s32 %s13, 1
      %p223 = scmp.lt.s32.totalorder %s18, 1
      %s224 = scalar_select %p223, %s18, 1
      %s225 = smul.addr %s224, 2
      %s226 = smul.addr %s225, 4
      %s227 = scalar_lea.vmem %s0, %s226
      %p228 = pneg %p39
      %p229 = pneg %p36
      %p230 = pneg %p60
      %p231 = pneg %p57
      %p232 = pneg %p81
      %p233 = pneg %p78
      %p234 = pneg %p102
      %p235 = pneg %p99
      %p236 = pneg %p128
      %p237 = pneg %p125
      %p238 = scmp.lt.s32.totalorder %s18, 1
      %s239 = scalar_select %p238, %s18, 1
      %s240 = smul.addr %s239, 2
      %s241 = smul.addr %s240, 4
      %s242 = scalar_lea.vmem %s4, %s241
      %p243 = pneg %p154
      %p244 = pneg %p151
      %p245 = scmp.lt.s32.totalorder %s18, 1
      %s246 = scalar_select %p245, %s18, 1
      %s247 = smul.addr %s246, 8
      %s248 = scalar_lea.vmem %s5, %s247
      %p249 = pneg %p180
      %p250 = pneg %p177
      %p251 = scmp.lt.s32.totalorder %s18, 1
      %s252 = scalar_select %p251, %s18, 1
      %s253 = smul.addr %s252, 8
      %s254 = scalar_lea.vmem %s6, %s253
      %p255 = scmp.lt.s32.totalorder %s18, 1
      %s256 = scalar_select %p255, %s18, 1
      %s257 = smul.addr %s256, 2
      %s258 = smul.addr %s257, 4
      %s259 = scalar_lea.vmem %s0, %s258
      %p260 = scmp.lt.s32.totalorder %s18, 1
      %s261 = scalar_select %p260, %s18, 1
      %s262 = smul.addr %s261, 2
      %s263 = smul.addr %s262, 4
      %s264 = scalar_lea.vmem %s4, %s263
      %p265 = scmp.lt.s32.totalorder %s18, 1
      %s266 = scalar_select %p265, %s18, 1
      %s267 = smul.addr %s266, 8
      %s268 = scalar_lea.vmem %s5, %s267
      %p269 = scmp.lt.s32.totalorder %s18, 1
      %s270 = scalar_select %p269, %s18, 1
      %s271 = smul.addr %s270, 8
      %s272 = scalar_lea.vmem %s6, %s271
      %v274 = vld [vmem:[%s259] sm:$0xff]
      %v276 = vcombine.high %v274, %v274
      %v278 = vpack.c.bf16 %v274, %v274
      %v279 = vpack.c.bf16 %v276, %v276
      %v280 = vld [vmem:[%s3] sm:$0x5]
      %v283 = vunpack.c.l.s4 1983009808
      %v284 = vunpack.c.0.s8 %v283
      %v285 = vlaneseq
      %v286 = vshrl.u32 %v285, 7
      %v287 = vsub.s32 %v284, %v286
      %v288 = vrot.slane %v280, %v287
      %v289 = vcombine.high %v288, %v288
      %v291 = vpack.i.b16 %v288, %v288
      %v293 = vlaneseq
      %v294 = vshrl.u32 %v293, 7
      %v295 = vsub.s32 0, %v294
      %v296 = vrot.slane %v291, %v295
      %v298 = vpack.i.b16 %v289, %v289
      %v300 = vlaneseq
      %v301 = vshrl.u32 %v300, 7
      %v302 = vsub.s32 0, %v301
      %v303 = vrot.slane %v298, %v302
      %306 = vrot.lane.b32.xlu0 %v296, 111
      %v307 = vpop.permute.xlu0 %306
      %308 = vrot.lane.b32.xlu0 %v303, 111
      %v309 = vpop.permute.xlu0 %308
      %vm310 = vcmask 908288
      %v311 = vsel %vm310, %v307, %v309
      %v315 = vmul.bf16 %v307, 0
      %v316 = vmul.bf16 %v278, %v311
      %v317 = vmul.bf16 %v279, %v309
      %v318 = vshrl.u32 %v288, 16
      %v319 = vpack.i.b16 %v318, %v318
      %v321 = vlaneseq
      %v322 = vshrl.u32 %v321, 7
      %v323 = vsub.s32 0, %v322
      %v324 = vrot.slane %v319, %v323
      %v325 = vshrl.u32 %v289, 16
      %v326 = vpack.i.b16 %v325, %v325
      %v328 = vlaneseq
      %v329 = vshrl.u32 %v328, 7
      %v330 = vsub.s32 0, %v329
      %v331 = vrot.slane %v326, %v330
      %334 = vrot.lane.b32.xlu0 %v324, 112
      %v335 = vpop.permute.xlu0 %334
      %336 = vrot.lane.b32.xlu0 %v331, 112
      %v337 = vpop.permute.xlu0 %336
      %vm338 = vcmask 916480
      %v339 = vsel %vm338, %v335, %v337
      %v343 = vmul.bf16 %v335, 0
      %v344 = vmul.bf16 %v278, %v339
      %v345 = vmul.bf16 %v279, %v337
      %v346 = vld [vmem:[%s3] sm:$0xa]
      %v349 = vunpack.c.l.s4 1983009808
      %v350 = vunpack.c.0.s8 %v349
      %v351 = vlaneseq
      %v352 = vshrl.u32 %v351, 7
      %v353 = vsub.s32 %v350, %v352
      %v354 = vrot.slane %v346, %v353
      %v355 = vcombine.high %v354, %v354
      %v357 = vpack.i.b16 %v354, %v354
      %v359 = vlaneseq
      %v360 = vshrl.u32 %v359, 7
      %v361 = vsub.s32 1, %v360
      %v362 = vrot.slane %v357, %v361
      %v364 = vpack.i.b16 %v355, %v355
      %v366 = vlaneseq
      %v367 = vshrl.u32 %v366, 7
      %v368 = vsub.s32 1, %v367
      %v369 = vrot.slane %v364, %v368
      %372 = vrot.lane.b32.xlu0 %v362, 113
      %v373 = vpop.permute.xlu0 %372
      %374 = vrot.lane.b32.xlu0 %v369, 113
      %v375 = vpop.permute.xlu0 %374
      %vm376 = vcmask 924672
      %v377 = vsel %vm376, %v373, %v375
      %v381 = vmul.bf16 %v373, 0
      %v382 = vmul.bf16 %v278, %v377
      %v383 = vmul.bf16 %v279, %v375
      %384 = vrot.lane.b32.xlu0 %v296, 127
      %v385 = vpop.permute.xlu0 %384
      %386 = vrot.lane.b32.xlu0 %v303, 127
      %v387 = vpop.permute.xlu0 %386
      %vm388 = vcmask 1039360
      %v389 = vsel %vm388, %v385, %v387
      %v393 = vmul.bf16 %v385, 0
      %v394 = vmul.bf16 %v278, %v389
      %v395 = vmul.bf16 %v279, %v387
      %v396 = vmul.bf16 %v278, %v324
      %v397 = vmul.bf16 %v279, %v331
      %398 = vrot.lane.b32.xlu0 %v362, 1
      %v399 = vpop.permute.xlu0 %398
      %400 = vrot.lane.b32.xlu0 %v369, 1
      %v401 = vpop.permute.xlu0 %400
      %vm402 = vcmask 7168
      %v403 = vsel %vm402, %v399, %v401
      %v407 = vmul.bf16 %v278, %v399
      %v408 = vmul.bf16 %v279, %v403
      %v409 = vmul.bf16 %v401, 0
      %410 = vrot.lane.b32.xlu0 %v296, 15
      %v411 = vpop.permute.xlu0 %410
      %412 = vrot.lane.b32.xlu0 %v303, 15
      %v413 = vpop.permute.xlu0 %412
      %vm414 = vcmask 121856
      %v415 = vsel %vm414, %v411, %v413
      %v419 = vmul.bf16 %v278, %v411
      %v420 = vmul.bf16 %v279, %v415
      %v421 = vmul.bf16 %v413, 0
      %422 = vrot.lane.b32.xlu0 %v324, 16
      %v423 = vpop.permute.xlu0 %422
      %424 = vrot.lane.b32.xlu0 %v331, 16
      %v425 = vpop.permute.xlu0 %424
      %vm426 = vcmask 130048
      %v427 = vsel %vm426, %v423, %v425
      %v431 = vmul.bf16 %v278, %v423
      %v432 = vmul.bf16 %v279, %v427
      %v433 = vmul.bf16 %v425, 0
      %434 = vrot.lane.b32.xlu0 %v362, 17
      %v435 = vpop.permute.xlu0 %434
      %436 = vrot.lane.b32.xlu0 %v369, 17
      %v437 = vpop.permute.xlu0 %436
      %vm438 = vcmask 138240
      %v439 = vsel %vm438, %v435, %v437
      %v443 = vmul.bf16 %v278, %v435
      %v444 = vmul.bf16 %v279, %v439
      %v445 = vmul.bf16 %v437, 0
      %v449 = vrot.slane %v343, 6
      %v450 = vrot.slane %v344, 6
      %v451 = vrot.slane %v345, 6
      %452 = vrot.lane.b32.xlu0 %v449, 127
      %v453 = vpop.permute.xlu0 %452
      %454 = vrot.lane.b32.xlu0 %v450, 127
      %v455 = vpop.permute.xlu0 %454
      %456 = vrot.lane.b32.xlu0 %v451, 127
      %v457 = vpop.permute.xlu0 %456
      %v458 = vsel %vm388, %v453, %v455
      %v459 = vsel %vm388, %v455, %v457
      %v463 = vrot.slane %v381, 4
      %v464 = vrot.slane %v382, 4
      %v465 = vrot.slane %v383, 4
      %466 = vrot.lane.b32.xlu0 %v463, 126
      %v467 = vpop.permute.xlu0 %466
      %468 = vrot.lane.b32.xlu0 %v464, 126
      %v469 = vpop.permute.xlu0 %468
      %470 = vrot.lane.b32.xlu0 %v465, 126
      %v471 = vpop.permute.xlu0 %470
      %vm472 = vcmask 1031168
      %v473 = vsel %vm472, %v467, %v469
      %v474 = vsel %vm472, %v469, %v471
      %v478 = vrot.slane %v393, 2
      %v479 = vrot.slane %v394, 2
      %v480 = vrot.slane %v395, 2
      %481 = vrot.lane.b32.xlu0 %v478, 112
      %v482 = vpop.permute.xlu0 %481
      %483 = vrot.lane.b32.xlu0 %v479, 112
      %v484 = vpop.permute.xlu0 %483
      %485 = vrot.lane.b32.xlu0 %v480, 112
      %v486 = vpop.permute.xlu0 %485
      %v487 = vsel %vm338, %v482, %v484
      %v488 = vsel %vm338, %v484, %v486
      %491 = vrot.lane.b32.xlu0 %v396, 111
      %v492 = vpop.permute.xlu0 %491
      %493 = vrot.lane.b32.xlu0 %v397, 111
      %v494 = vpop.permute.xlu0 %493
      %v495 = vsel %vm310, %v492, %v494
      %v499 = vrot.slane %v407, 6
      %v500 = vrot.slane %v408, 6
      %v501 = vrot.slane %v409, 6
      %502 = vrot.lane.b32.xlu0 %v499, 110
      %v503 = vpop.permute.xlu0 %502
      %504 = vrot.lane.b32.xlu0 %v500, 110
      %v505 = vpop.permute.xlu0 %504
      %506 = vrot.lane.b32.xlu0 %v501, 110
      %v507 = vpop.permute.xlu0 %506
      %vm508 = vcmask 900096
      %v509 = vsel %vm508, %v503, %v505
      %v510 = vsel %vm508, %v505, %v507
      %v514 = vrot.slane %v419, 4
      %v515 = vrot.slane %v420, 4
      %v516 = vrot.slane %v421, 4
      %517 = vrot.lane.b32.xlu0 %v514, 96
      %v518 = vpop.permute.xlu0 %517
      %519 = vrot.lane.b32.xlu0 %v515, 96
      %v520 = vpop.permute.xlu0 %519
      %521 = vrot.lane.b32.xlu0 %v516, 96
      %v522 = vpop.permute.xlu0 %521
      %vm523 = vcmask 785408
      %v524 = vsel %vm523, %v518, %v520
      %v525 = vsel %vm523, %v520, %v522
      %v529 = vrot.slane %v431, 2
      %v530 = vrot.slane %v432, 2
      %v531 = vrot.slane %v433, 2
      %532 = vrot.lane.b32.xlu0 %v529, 95
      %v533 = vpop.permute.xlu0 %532
      %534 = vrot.lane.b32.xlu0 %v530, 95
      %v535 = vpop.permute.xlu0 %534
      %536 = vrot.lane.b32.xlu0 %v531, 95
      %v537 = vpop.permute.xlu0 %536
      %vm538 = vcmask 777216
      %v539 = vsel %vm538, %v533, %v535
      %v540 = vsel %vm538, %v535, %v537
      %544 = vrot.lane.b32.xlu0 %v443, 94
      %v545 = vpop.permute.xlu0 %544
      %546 = vrot.lane.b32.xlu0 %v444, 94
      %v547 = vpop.permute.xlu0 %546
      %548 = vrot.lane.b32.xlu0 %v445, 94
      %v549 = vpop.permute.xlu0 %548
      %vm550 = vcmask 769024
      %v551 = vsel %vm550, %v545, %v547
      %v552 = vsel %vm550, %v547, %v549
      %vm553 = vcmask 1041408
      %v556 = vsel %vm553, %v315, %v458
      %v559 = vsel %vm553, %v316, %v459
      %v562 = vsel %vm553, %v317, %v457
      %vm563 = vcmask 1043456
      %v565 = vsel %vm563, %v556, %v473
      %v567 = vsel %vm563, %v559, %v474
      %v569 = vsel %vm563, %v562, %v471
      %vm570 = vcmask 1045504
      %v572 = vsel %vm570, %v565, %v487
      %v574 = vsel %vm570, %v567, %v488
      %v576 = vsel %vm570, %v569, %v486
      %v579 = vsel %vm553, %v492, %v503
      %v582 = vsel %vm553, %v495, %v509
      %v585 = vsel %vm553, %v494, %v510
      %v587 = vsel %vm563, %v579, %v518
      %v589 = vsel %vm563, %v582, %v524
      %v591 = vsel %vm563, %v585, %v525
      %v593 = vsel %vm570, %v587, %v533
      %v595 = vsel %vm570, %v589, %v539
      %v597 = vsel %vm570, %v591, %v540
      %v598 = vld [vmem:[%s1] sm:$0xf]
      %v599 = vld [vmem:[%s2] sm:$0xff]
      %601 = vset.pattern.permute.xlu0 0
      %602 = vperm.xlu0 %601, %v599
      %v603 = vpop.permute.xlu0 %602
      %611 = vrot.lane.b32.xlu0 %v572, 17
      %v612 = vpop.permute.xlu0 %611
      %613 = vrot.lane.b32.xlu0 %v574, 17
      %v614 = vpop.permute.xlu0 %613
      %615 = vrot.lane.b32.xlu0 %v576, 17
      %v616 = vpop.permute.xlu0 %615
      %617 = vrot.lane.b32.xlu0 %v593, 17
      %v618 = vpop.permute.xlu0 %617
      %619 = vrot.lane.b32.xlu0 %v595, 17
      %v620 = vpop.permute.xlu0 %619
      %621 = vrot.lane.b32.xlu0 %v597, 17
      %v622 = vpop.permute.xlu0 %621
      %623 = vrot.lane.b32.xlu0 %v545, 17
      %v624 = vpop.permute.xlu0 %623
      %625 = vrot.lane.b32.xlu0 %v551, 17
      %v626 = vpop.permute.xlu0 %625
      %627 = vrot.lane.b32.xlu0 %v552, 17
      %v628 = vpop.permute.xlu0 %627
      %v629 = vsel %vm438, %v612, %v614
      %v630 = vsel %vm438, %v614, %v616
      %v631 = vsel %vm438, %v618, %v620
      %v632 = vsel %vm438, %v620, %v622
      %v633 = vsel %vm438, %v624, %v626
      %v634 = vsel %vm438, %v626, %v628
      %vm639 = vcmask 293888
      %v641 = vsel %vm639, %v598, 0
      %v644 = vsel %vm553, %v633, 0
      %v647 = vsel %vm553, %v634, 0
      %649 = vmatprep.subr.bf16.mxu0 %v630
      %650 = vmatpush1.bf16.msra.mxu0 %v629
      %651 = vmatprep.subr.bf16.mxu0 %v632
      %652 = vmatpush1.bf16.msra.mxu0 %v631
      %653 = vmatprep.subr.bf16.mxu0 %v647
      %654 = vmatpush1.bf16.msra.mxu0 %v644
      %655 = vmatprep.subr.bf16.mxu0 0
      %656 = vmatpush1.bf16.msra.mxu0 0
      %657 = vmatprep.subr.bf16.mxu0 0
      %658 = vmatpush1.bf16.msra.mxu0 0
      %659 = vmatprep.subr.bf16.mxu0 0
      %660 = vmatpush1.bf16.msra.mxu0 0
      %661 = vmatprep.subr.bf16.mxu0 0
      %662 = vmatpush1.bf16.msra.mxu0 0
      %663 = vmatprep.subr.bf16.mxu0 0
      %664 = vmatpush1.bf16.msra.mxu0 0
      %665 = vmatprep.subr.bf16.mxu0 0
      %666 = vmatpush1.bf16.msra.mxu0 0
      %667 = vmatprep.subr.bf16.mxu0 0
      %668 = vmatpush1.bf16.msra.mxu0 0
      %669 = vmatprep.subr.bf16.mxu0 0
      %670 = vmatpush1.bf16.msra.mxu0 0
      %671 = vmatprep.subr.bf16.mxu0 0
      %672 = vmatpush1.bf16.msra.mxu0 0
      %673 = vmatprep.subr.bf16.mxu0 0
      %674 = vmatpush1.bf16.msra.mxu0 0
      %675 = vmatprep.subr.bf16.mxu0 0
      %676 = vmatpush1.bf16.msra.mxu0 0
      %677 = vmatprep.subr.bf16.mxu0 0
      %678 = vmatpush1.bf16.msra.mxu0 0
      %679 = vmatprep.subr.bf16.mxu0 0
      %680 = vmatpush1.bf16.msra.mxu0 0
      %681 = vmatprep.mubr.bf16.mxu0 0
      %682 = vmatmul.mubr.bf16.gmra.mrb[0].mxu0 %v641
      %v683 = vpop.f32.mrb[0].mxu0
      %v684 = vadd.f32 %v603, %v683
      %v685 = vpop.f32.mrb[0].mxu0
      %v686 = vadd.f32 %v603, %v685
      %v687 = vpop.f32.mrb[0].mxu0
      %v688 = vpop.f32.mrb[0].mxu0
      %689 = vdwg.mxu0
      %v690 = vpack.c.bf16 %v684, %v684
      %v691 = vpack.c.bf16 %v686, %v686
      %v694 = vunpack.c.l.b16 %v690
      %v695 = vunpack.c.l.b16 %v691
      %v696 = vpack.c.b16 %v695, %v694
      %698 = vst [vmem:[%s264] sm:$0xff] %v696
      %v699 = vunpack.c.l.bf16 %v690
      %v700 = vunpack.c.l.bf16 %v691
      %v701 = vadd.f32 %v699, %v700
      %702 = vadd.xlane.f32.xlu0 %v701
      %v703 = vpop.xlane.xlu0 %702
      %vm704 = vcmask 7168
      %705 = vst.msk [vmem:[%s268] sm:$0xff] %vm704, %v703
      %v706 = vmul.f32 %v699, %v699
      %v707 = vmul.f32 %v700, %v700
      %v708 = vadd.f32 %v706, %v707
      %709 = vadd.xlane.f32.xlu0 %v708
      %v710 = vpop.xlane.xlu0 %709
      %711 = vst.msk [vmem:[%s272] sm:$0xff] %vm704, %v710
      %p712 = scmp.lt.s32.totalorder %s18, 1
      %s713 = scalar_select %p712, %s18, 1
      %s714 = smul.addr %s713, 2
      %s715 = smul.addr %s714, 4
      %s716 = scalar_lea.vmem %s4, %s715
      %p717 = scmp.lt.s32.totalorder %s18, 1
      %s718 = scalar_select %p717, %s18, 1
      %s719 = smul.addr %s718, 8
      %s720 = scalar_lea.vmem %s5, %s719
      %p721 = scmp.lt.s32.totalorder %s18, 1
      %s722 = scalar_select %p721, %s18, 1
      %s723 = smul.addr %s722, 8
      %s724 = scalar_lea.vmem %s6, %s723
      // Predicated region
      $region37: #{double_conv.3} parent=35 // pred_check
        %p725 = pneg %p125
      $region38: #{double_conv.3} parent=35 // pred_check_branch
        %727 = sbr.rel (%p725) target = $region40
      $region39: #{double_conv.3} parent=35 // pred_region
        _
      $region40: #{double_conv.3} parent=35 // pred_fallthru
        _
      // Predicated region
      $region41: #{double_conv.3} parent=35 // pred_check
        %p728 = pneg %p151
      $region42: #{double_conv.3} parent=35 // pred_check_branch
        %730 = sbr.rel (%p728) target = $region44
      $region43: #{double_conv.3} parent=35 // pred_region
        _
      $region44: #{double_conv.3} parent=35 // pred_fallthru
        _
      // Predicated region
      $region45: #{double_conv.3} parent=35 // pred_check
        %p731 = pneg %p177
      $region46: #{double_conv.3} parent=35 // pred_check_branch
        %733 = sbr.rel (%p731) target = $region48
      $region47: #{double_conv.3} parent=35 // pred_region
        _
      $region48: #{double_conv.3} parent=35 // pred_fallthru
        _
    $region36: #{double_conv.3} parent=5 // pred_fallthru
      _
    %p734 = scmp.le.s32.totalorder 2, %s13
    // Predicated region
    $region49: #{double_conv.3} parent=5 // pred_check
      %p735 = pneg %p734
    $region50: #{double_conv.3} parent=5 // pred_check_branch
      %737 = sbr.rel (%p735) target = $region52
    $region51: #{double_conv.3} parent=5 // pred_region
      %s738 = ssub.s32 %s13, 2
      // Predicated region
      $region53: #{double_conv.3} parent=51 // pred_check
        %p739 = pneg %p131
      $region54: #{double_conv.3} parent=51 // pred_check_branch
        %741 = sbr.rel (%p739) target = $region56
      $region55: #{double_conv.3} parent=51 // pred_region
        %p742 = scmp.lt.s32.totalorder %s19, 1
        %s743 = scalar_select %p742, %s19, 1
        %s744 = smul.addr %s743, 2
        %s745 = smul.addr %s744, 4
        %s746 = scalar_lea.vmem %s4, %s745
      $region56: #{double_conv.3} parent=51 // pred_fallthru
        _
      // Predicated region
      $region57: #{double_conv.3} parent=51 // pred_check
        %p747 = pneg %p157
      $region58: #{double_conv.3} parent=51 // pred_check_branch
        %749 = sbr.rel (%p747) target = $region60
      $region59: #{double_conv.3} parent=51 // pred_region
        %p750 = scmp.lt.s32.totalorder %s19, 1
        %s751 = scalar_select %p750, %s19, 1
        %s752 = smul.addr %s751, 8
        %s753 = scalar_lea.vmem %s5, %s752
      $region60: #{double_conv.3} parent=51 // pred_fallthru
        _
      // Predicated region
      $region61: #{double_conv.3} parent=51 // pred_check
        %p754 = pneg %p183
      $region62: #{double_conv.3} parent=51 // pred_check_branch
        %756 = sbr.rel (%p754) target = $region64
      $region63: #{double_conv.3} parent=51 // pred_region
        %p757 = scmp.lt.s32.totalorder %s19, 1
        %s758 = scalar_select %p757, %s19, 1
        %s759 = smul.addr %s758, 8
        %s760 = scalar_lea.vmem %s6, %s759
      $region64: #{double_conv.3} parent=51 // pred_fallthru
        _
    $region52: #{double_conv.3} parent=5 // pred_fallthru
      _
  $region6: #{double_conv.3} parent=0 // loop_footer
    %s17 = sadd.s32 1, %s13
  $region7: #{double_conv.3} parent=0 // loop_footer_branch
    %12 = sbr.rel target = $region3
  $region8: #{double_conv.3} parent=0 // loop_exit
    _

// kernel: double_conv.4
$region0: #{double_conv.4}
  #allocation0 [shape = 'u32[]', space=smem, size = 0x4, offset = 0x4, fixed_abs, tag = 'smem constant byte address 0x4 - core index']
  #allocation1 [shape = 'u32[144,128]{1,0:T(1,128)}', space=vmem, size = 0x12000, scoped, tag = 'internal scratch']
  %s0 = inlined_call_operand.vmem [shape: bf16[2,8,256], index: 0, kind: input, shape index: {}]
  %s1 = inlined_call_operand.vmem [shape: bf16[8,72], index: 1, kind: input, shape index: {}]
  %s2 = inlined_call_operand.vmem [shape: f32[8,1], index: 2, kind: input, shape index: {}]
  %s3 = inlined_call_operand.vmem [shape: bf16[3,256], index: 3, kind: input, shape index: {}]
  %s4 = inlined_call_operand.vmem [shape: f32[8,1], index: 4, kind: input, shape index: {}]
  %s5 = inlined_call_operand.vmem [shape: f32[8,1], index: 5, kind: input, shape index: {}]
  %s6 = inlined_call_operand.vmem [shape: bf16[2,8,256], index: 6, kind: output, shape index: {0}]
  %s7 = inlined_call_operand.vmem [shape: f32[2,8,1], index: 7, kind: output, shape index: {1}]
  %s8 = inlined_call_operand.vmem [shape: f32[2,8,1], index: 8, kind: output, shape index: {2}]
  %9 = xla_tuple %s6, %s7, %s8
  %s10 = sld [smem:[#allocation0]]
  $region73: #{double_conv.4} parent=0
    _
  %s12 = ssub.s32 1, %s10
  %s13 = scalar_select 0, %s12, %s10
  loop: start=0, step=1, limit=4
  $region2: #{double_conv.4} parent=0 // loop_pre_header
    _
  $region3: #{double_conv.4} parent=0 // loop_header
    %s15 = sphi 0, %s19
    %p16 = scmp.ge.s32.totalorder %s15, 4
    %s25 = sphi 0, %s27
    %s28 = sphi 0, %s25
    %s29 = sphi 0, %s28
    %s45 = sphi 0, %s29
    %s49 = sphi 0, %s49
    %s51 = sphi 0, %s49
    %s52 = sphi 0, %s51
    %s66 = sphi 0, %s52
    %s70 = sphi 0, %s70
    %s72 = sphi 0, %s70
    %s73 = sphi 0, %s72
    %s87 = sphi 0, %s73
    %s91 = sphi 0, %s91
    %s93 = sphi 0, %s91
    %s94 = sphi 0, %s93
    %s108 = sphi 0, %s94
    %s112 = sphi 0, %s112
    %s114 = sphi 0, %s112
    %s115 = sphi 0, %s114
    %s129 = sphi 0, %s115
    %s133 = sphi 0, %s133
    %s135 = sphi 0, %s133
    %s136 = sphi 0, %s135
    %s150 = sphi 0, %s136
    %s156 = sphi 0, %s158
    %s159 = sphi 0, %s156
    %s160 = sphi 0, %s159
    %s176 = sphi 0, %s160
    %s182 = sphi 0, %s184
    %s185 = sphi 0, %s182
    %s186 = sphi 0, %s185
    %s202 = sphi 0, %s186
    %s208 = sphi 0, %s210
    %s211 = sphi 0, %s208
    %s212 = sphi 0, %s211
    %s228 = sphi 0, %s212
  $region4: #{double_conv.4} parent=0 // loop_header_branch
    %18 = sbr.rel (%p16) target = $region8
  $region5: #{double_conv.4} parent=0 // loop_body
    %s20 = ssub.s32 %s15, 1
    %s21 = ssub.s32 %s15, 2
    %s22 = sadd.s32 %s15, 1
    %s23 = ssub.s32 %s15, %s22
    %p24 = scmp.eq.s32.totalorder %s23, 0
    %s26 = sadd.s32 %s25, 1
    %s27 = scalar_select %p24, %s25, %s26
    %p30 = pneg %p24
    %p31 = scmp.eq.s32.totalorder %s15, 1
    %p32 = por %p30, %p31
    %p33 = scmp.ne.s32.totalorder %s25, %s28
    %p34 = scmp.eq.s32.totalorder %s15, 0
    %p35 = por %p33, %p34
    %p36 = scmp.ne.s32.totalorder %s25, %s28
    %p37 = scmp.eq.s32.totalorder %s20, 1
    %p38 = por %p36, %p37
    %p39 = scmp.ne.s32.totalorder %s28, %s29
    %p40 = scmp.eq.s32.totalorder %s20, 0
    %p41 = por %p39, %p40
    %p42 = scmp.ne.s32.totalorder %s28, %s29
    %p43 = scmp.eq.s32.totalorder %s21, 1
    %p44 = por %p42, %p43
    %p46 = scmp.ne.s32.totalorder %s29, %s45
    %p47 = scmp.eq.s32.totalorder %s21, 0
    %p48 = por %p46, %p47
    %s50 = sadd.s32 %s49, 1
    %p53 = scmp.eq.s32.totalorder %s15, 1
    %p54 = scmp.ne.s32.totalorder %s49, %s51
    %p55 = scmp.eq.s32.totalorder %s15, 0
    %p56 = por %p54, %p55
    %p57 = scmp.ne.s32.totalorder %s49, %s51
    %p58 = scmp.eq.s32.totalorder %s20, 1
    %p59 = por %p57, %p58
    %p60 = scmp.ne.s32.totalorder %s51, %s52
    %p61 = scmp.eq.s32.totalorder %s20, 0
    %p62 = por %p60, %p61
    %p63 = scmp.ne.s32.totalorder %s51, %s52
    %p64 = scmp.eq.s32.totalorder %s21, 1
    %p65 = por %p63, %p64
    %p67 = scmp.ne.s32.totalorder %s52, %s66
    %p68 = scmp.eq.s32.totalorder %s21, 0
    %p69 = por %p67, %p68
    %s71 = sadd.s32 %s70, 1
    %p74 = scmp.eq.s32.totalorder %s15, 1
    %p75 = scmp.ne.s32.totalorder %s70, %s72
    %p76 = scmp.eq.s32.totalorder %s15, 0
    %p77 = por %p75, %p76
    %p78 = scmp.ne.s32.totalorder %s70, %s72
    %p79 = scmp.eq.s32.totalorder %s20, 1
    %p80 = por %p78, %p79
    %p81 = scmp.ne.s32.totalorder %s72, %s73
    %p82 = scmp.eq.s32.totalorder %s20, 0
    %p83 = por %p81, %p82
    %p84 = scmp.ne.s32.totalorder %s72, %s73
    %p85 = scmp.eq.s32.totalorder %s21, 1
    %p86 = por %p84, %p85
    %p88 = scmp.ne.s32.totalorder %s73, %s87
    %p89 = scmp.eq.s32.totalorder %s21, 0
    %p90 = por %p88, %p89
    %s92 = sadd.s32 %s91, 1
    %p95 = scmp.eq.s32.totalorder %s15, 1
    %p96 = scmp.ne.s32.totalorder %s91, %s93
    %p97 = scmp.eq.s32.totalorder %s15, 0
    %p98 = por %p96, %p97
    %p99 = scmp.ne.s32.totalorder %s91, %s93
    %p100 = scmp.eq.s32.totalorder %s20, 1
    %p101 = por %p99, %p100
    %p102 = scmp.ne.s32.totalorder %s93, %s94
    %p103 = scmp.eq.s32.totalorder %s20, 0
    %p104 = por %p102, %p103
    %p105 = scmp.ne.s32.totalorder %s93, %s94
    %p106 = scmp.eq.s32.totalorder %s21, 1
    %p107 = por %p105, %p106
    %p109 = scmp.ne.s32.totalorder %s94, %s108
    %p110 = scmp.eq.s32.totalorder %s21, 0
    %p111 = por %p109, %p110
    %s113 = sadd.s32 %s112, 1
    %p116 = scmp.eq.s32.totalorder %s15, 1
    %p117 = scmp.ne.s32.totalorder %s112, %s114
    %p118 = scmp.eq.s32.totalorder %s15, 0
    %p119 = por %p117, %p118
    %p120 = scmp.ne.s32.totalorder %s112, %s114
    %p121 = scmp.eq.s32.totalorder %s20, 1
    %p122 = por %p120, %p121
    %p123 = scmp.ne.s32.totalorder %s114, %s115
    %p124 = scmp.eq.s32.totalorder %s20, 0
    %p125 = por %p123, %p124
    %p126 = scmp.ne.s32.totalorder %s114, %s115
    %p127 = scmp.eq.s32.totalorder %s21, 1
    %p128 = por %p126, %p127
    %p130 = scmp.ne.s32.totalorder %s115, %s129
    %p131 = scmp.eq.s32.totalorder %s21, 0
    %p132 = por %p130, %p131
    %s134 = sadd.s32 %s133, 1
    %p137 = scmp.eq.s32.totalorder %s15, 1
    %p138 = scmp.ne.s32.totalorder %s133, %s135
    %p139 = scmp.eq.s32.totalorder %s15, 0
    %p140 = por %p138, %p139
    %p141 = scmp.ne.s32.totalorder %s133, %s135
    %p142 = scmp.eq.s32.totalorder %s20, 1
    %p143 = por %p141, %p142
    %p144 = scmp.ne.s32.totalorder %s135, %s136
    %p145 = scmp.eq.s32.totalorder %s20, 0
    %p146 = por %p144, %p145
    %p147 = scmp.ne.s32.totalorder %s135, %s136
    %p148 = scmp.eq.s32.totalorder %s21, 1
    %p149 = por %p147, %p148
    %p151 = scmp.ne.s32.totalorder %s136, %s150
    %p152 = scmp.eq.s32.totalorder %s21, 0
    %p153 = por %p151, %p152
    %s154 = ssub.s32 %s15, %s22
    %p155 = scmp.eq.s32.totalorder %s154, 0
    %s157 = sadd.s32 %s156, 1
    %s158 = scalar_select %p155, %s156, %s157
    %p161 = pneg %p155
    %p162 = scmp.eq.s32.totalorder %s15, 1
    %p163 = por %p161, %p162
    %p164 = scmp.ne.s32.totalorder %s156, %s159
    %p165 = scmp.eq.s32.totalorder %s15, 0
    %p166 = por %p164, %p165
    %p167 = scmp.ne.s32.totalorder %s156, %s159
    %p168 = scmp.eq.s32.totalorder %s20, 1
    %p169 = por %p167, %p168
    %p170 = scmp.ne.s32.totalorder %s159, %s160
    %p171 = scmp.eq.s32.totalorder %s20, 0
    %p172 = por %p170, %p171
    %p173 = scmp.ne.s32.totalorder %s159, %s160
    %p174 = scmp.eq.s32.totalorder %s21, 1
    %p175 = por %p173, %p174
    %p177 = scmp.ne.s32.totalorder %s160, %s176
    %p178 = scmp.eq.s32.totalorder %s21, 0
    %p179 = por %p177, %p178
    %s180 = ssub.s32 %s15, %s22
    %p181 = scmp.eq.s32.totalorder %s180, 0
    %s183 = sadd.s32 %s182, 1
    %s184 = scalar_select %p181, %s182, %s183
    %p187 = pneg %p181
    %p188 = scmp.eq.s32.totalorder %s15, 1
    %p189 = por %p187, %p188
    %p190 = scmp.ne.s32.totalorder %s182, %s185
    %p191 = scmp.eq.s32.totalorder %s15, 0
    %p192 = por %p190, %p191
    %p193 = scmp.ne.s32.totalorder %s182, %s185
    %p194 = scmp.eq.s32.totalorder %s20, 1
    %p195 = por %p193, %p194
    %p196 = scmp.ne.s32.totalorder %s185, %s186
    %p197 = scmp.eq.s32.totalorder %s20, 0
    %p198 = por %p196, %p197
    %p199 = scmp.ne.s32.totalorder %s185, %s186
    %p200 = scmp.eq.s32.totalorder %s21, 1
    %p201 = por %p199, %p200
    %p203 = scmp.ne.s32.totalorder %s186, %s202
    %p204 = scmp.eq.s32.totalorder %s21, 0
    %p205 = por %p203, %p204
    %s206 = ssub.s32 %s15, %s22
    %p207 = scmp.eq.s32.totalorder %s206, 0
    %s209 = sadd.s32 %s208, 1
    %s210 = scalar_select %p207, %s208, %s209
    %p213 = pneg %p207
    %p214 = scmp.eq.s32.totalorder %s15, 1
    %p215 = por %p213, %p214
    %p216 = scmp.ne.s32.totalorder %s208, %s211
    %p217 = scmp.eq.s32.totalorder %s15, 0
    %p218 = por %p216, %p217
    %p219 = scmp.ne.s32.totalorder %s208, %s211
    %p220 = scmp.eq.s32.totalorder %s20, 1
    %p221 = por %p219, %p220
    %p222 = scmp.ne.s32.totalorder %s211, %s212
    %p223 = scmp.eq.s32.totalorder %s20, 0
    %p224 = por %p222, %p223
    %p225 = scmp.ne.s32.totalorder %s211, %s212
    %p226 = scmp.eq.s32.totalorder %s21, 1
    %p227 = por %p225, %p226
    %p229 = scmp.ne.s32.totalorder %s212, %s228
    %p230 = scmp.eq.s32.totalorder %s21, 0
    %p231 = por %p229, %p230
    %p232 = scmp.le.s32.totalorder 1, %s15
    %p233 = scmp.lt.s32.totalorder %s15, 3
    %p234 = pnand %p232, %p233
    %p235 = pneg %p234
    // Predicated region
    $region9: #{double_conv.4} parent=5 // pred_check
      _
    $region10: #{double_conv.4} parent=5 // pred_check_branch
      %237 = sbr.rel (%p234) target = $region12
    $region11: #{double_conv.4} parent=5 // pred_region
      %s238 = ssub.s32 %s15, 1
      // Predicated region
      $region13: #{double_conv.4} parent=11 // pred_check
        %p239 = pneg %p62
      $region14: #{double_conv.4} parent=11 // pred_check_branch
        %241 = sbr.rel (%p239) target = $region16
      $region15: #{double_conv.4} parent=11 // pred_region
        _
      $region16: #{double_conv.4} parent=11 // pred_fallthru
        _
      // Predicated region
      $region17: #{double_conv.4} parent=11 // pred_check
        %p242 = pneg %p83
      $region18: #{double_conv.4} parent=11 // pred_check_branch
        %244 = sbr.rel (%p242) target = $region20
      $region19: #{double_conv.4} parent=11 // pred_region
        _
      $region20: #{double_conv.4} parent=11 // pred_fallthru
        _
      // Predicated region
      $region21: #{double_conv.4} parent=11 // pred_check
        %p245 = pneg %p104
      $region22: #{double_conv.4} parent=11 // pred_check_branch
        %247 = sbr.rel (%p245) target = $region24
      $region23: #{double_conv.4} parent=11 // pred_region
        _
      $region24: #{double_conv.4} parent=11 // pred_fallthru
        _
      // Predicated region
      $region25: #{double_conv.4} parent=11 // pred_check
        %p248 = pneg %p125
      $region26: #{double_conv.4} parent=11 // pred_check_branch
        %250 = sbr.rel (%p248) target = $region28
      $region27: #{double_conv.4} parent=11 // pred_region
        _
      $region28: #{double_conv.4} parent=11 // pred_fallthru
        _
      // Predicated region
      $region29: #{double_conv.4} parent=11 // pred_check
        %p251 = pneg %p146
      $region30: #{double_conv.4} parent=11 // pred_check_branch
        %253 = sbr.rel (%p251) target = $region32
      $region31: #{double_conv.4} parent=11 // pred_region
        _
      $region32: #{double_conv.4} parent=11 // pred_fallthru
        _
    $region12: #{double_conv.4} parent=5 // pred_fallthru
      _
    %p254 = scmp.lt.s32.totalorder %s15, 2
    // Predicated region
    $region33: #{double_conv.4} parent=5 // pred_check
      %p255 = pneg %p254
    $region34: #{double_conv.4} parent=5 // pred_check_branch
      %257 = sbr.rel (%p255) target = $region36
    $region35: #{double_conv.4} parent=5 // pred_region
      // Predicated region
      $region37: #{double_conv.4} parent=35 // pred_check
        %p258 = pneg %p35
      $region38: #{double_conv.4} parent=35 // pred_check_branch
        %260 = sbr.rel (%p258) target = $region40
      $region39: #{double_conv.4} parent=35 // pred_region
        %p261 = scmp.lt.s32.totalorder %s15, 1
        %s262 = scalar_select %p261, %s15, 1
        %s263 = smul.addr %s262, 2
        %s264 = smul.addr %s263, 4
        %s265 = scalar_lea.vmem %s0, %s264
      $region40: #{double_conv.4} parent=35 // pred_fallthru
        _
    $region36: #{double_conv.4} parent=5 // pred_fallthru
      _
    %p266 = scmp.le.s32.totalorder 1, %s15
    %p267 = scmp.lt.s32.totalorder %s15, 3
    %p268 = pnand %p266, %p267
    %p269 = pneg %p268
    // Predicated region
    $region41: #{double_conv.4} parent=5 // pred_check
      _
    $region42: #{double_conv.4} parent=5 // pred_check_branch
      %271 = sbr.rel (%p268) target = $region44
    $region43: #{double_conv.4} parent=5 // pred_region
      %s272 = ssub.s32 %s15, 1
      %p273 = scmp.lt.s32.totalorder %s20, 1
      %s274 = scalar_select %p273, %s20, 1
      %s275 = smul.addr %s274, 2
      %s276 = smul.addr %s275, 4
      %s277 = scalar_lea.vmem %s0, %s276
      %p278 = pneg %p41
      %p279 = pneg %p38
      %p280 = pneg %p62
      %p281 = pneg %p59
      %p282 = pneg %p83
      %p283 = pneg %p80
      %p284 = pneg %p104
      %p285 = pneg %p101
      %p286 = pneg %p125
      %p287 = pneg %p122
      %p288 = pneg %p146
      %p289 = pneg %p143
      %p290 = pneg %p172
      %p291 = pneg %p169
      %p292 = scmp.lt.s32.totalorder %s20, 1
      %s293 = scalar_select %p292, %s20, 1
      %s294 = smul.addr %s293, 2
      %s295 = smul.addr %s294, 4
      %s296 = scalar_lea.vmem %s6, %s295
      %p297 = pneg %p198
      %p298 = pneg %p195
      %p299 = scmp.lt.s32.totalorder %s20, 1
      %s300 = scalar_select %p299, %s20, 1
      %s301 = smul.addr %s300, 8
      %s302 = scalar_lea.vmem %s7, %s301
      %p303 = pneg %p224
      %p304 = pneg %p221
      %p305 = scmp.lt.s32.totalorder %s20, 1
      %s306 = scalar_select %p305, %s20, 1
      %s307 = smul.addr %s306, 8
      %s308 = scalar_lea.vmem %s8, %s307
      %p309 = scmp.lt.s32.totalorder %s20, 1
      %s310 = scalar_select %p309, %s20, 1
      %s311 = smul.addr %s310, 2
      %s312 = smul.addr %s311, 4
      %s313 = scalar_lea.vmem %s0, %s312
      %p314 = scmp.lt.s32.totalorder %s20, 1
      %s315 = scalar_select %p314, %s20, 1
      %s316 = smul.addr %s315, 2
      %s317 = smul.addr %s316, 4
      %s318 = scalar_lea.vmem %s6, %s317
      %p319 = scmp.lt.s32.totalorder %s20, 1
      %s320 = scalar_select %p319, %s20, 1
      %s321 = smul.addr %s320, 8
      %s322 = scalar_lea.vmem %s7, %s321
      %p323 = scmp.lt.s32.totalorder %s20, 1
      %s324 = scalar_select %p323, %s20, 1
      %s325 = smul.addr %s324, 8
      %s326 = scalar_lea.vmem %s8, %s325
      %v328 = vld [vmem:[%s313] sm:$0xff]
      %v329 = vunpack.c.l.bf16 %v328
      %v330 = vunpack.c.h.bf16 %v328
      %v331 = vld [vmem:[%s4] sm:$0xff]
      %333 = vset.pattern.permute.xlu0 0
      %334 = vperm.xlu0 %333, %v331
      %v335 = vpop.permute.xlu0 %334
      %v337 = vmul.f32 %v329, %v335
      %v338 = vmul.f32 %v330, %v335
      %v339 = vld [vmem:[%s5] sm:$0xff]
      %341 = vset.pattern.permute.xlu0 0
      %342 = vperm.xlu0 %341, %v339
      %v343 = vpop.permute.xlu0 %342
      %v345 = vadd.f32 %v337, %v343
      %v346 = vadd.f32 %v338, %v343
      %v347 = vmax.f32 %v345, 0.0
      %v348 = vmax.f32 %v346, 0.0
      %v349 = vpack.c.bf16 %v347, %v347
      %v350 = vpack.c.bf16 %v348, %v348
      %v351 = vld [vmem:[%s3] sm:$0x5]
      %v354 = vunpack.c.l.s4 1983009808
      %v355 = vunpack.c.0.s8 %v354
      %v356 = vlaneseq
      %v357 = vshrl.u32 %v356, 7
      %v358 = vsub.s32 %v355, %v357
      %v359 = vrot.slane %v351, %v358
      %v360 = vcombine.high %v359, %v359
      %v362 = vpack.i.b16 %v359, %v359
      %v364 = vlaneseq
      %v365 = vshrl.u32 %v364, 7
      %v366 = vsub.s32 0, %v365
      %v367 = vrot.slane %v362, %v366
      %v369 = vpack.i.b16 %v360, %v360
      %v371 = vlaneseq
      %v372 = vshrl.u32 %v371, 7
      %v373 = vsub.s32 0, %v372
      %v374 = vrot.slane %v369, %v373
      %377 = vrot.lane.b32.xlu0 %v367, 111
      %v378 = vpop.permute.xlu0 %377
      %379 = vrot.lane.b32.xlu0 %v374, 111
      %v380 = vpop.permute.xlu0 %379
      %vm381 = vcmask 908288
      %v382 = vsel %vm381, %v378, %v380
      %v386 = vmul.bf16 %v378, 0
      %v387 = vmul.bf16 %v349, %v382
      %v388 = vmul.bf16 %v350, %v380
      %v389 = vshrl.u32 %v359, 16
      %v390 = vpack.i.b16 %v389, %v389
      %v392 = vlaneseq
      %v393 = vshrl.u32 %v392, 7
      %v394 = vsub.s32 0, %v393
      %v395 = vrot.slane %v390, %v394
      %v396 = vshrl.u32 %v360, 16
      %v397 = vpack.i.b16 %v396, %v396
      %v399 = vlaneseq
      %v400 = vshrl.u32 %v399, 7
      %v401 = vsub.s32 0, %v400
      %v402 = vrot.slane %v397, %v401
      %405 = vrot.lane.b32.xlu0 %v395, 112
      %v406 = vpop.permute.xlu0 %405
      %407 = vrot.lane.b32.xlu0 %v402, 112
      %v408 = vpop.permute.xlu0 %407
      %vm409 = vcmask 916480
      %v410 = vsel %vm409, %v406, %v408
      %v414 = vmul.bf16 %v406, 0
      %v415 = vmul.bf16 %v349, %v410
      %v416 = vmul.bf16 %v350, %v408
      %v417 = vld [vmem:[%s3] sm:$0xa]
      %v420 = vunpack.c.l.s4 1983009808
      %v421 = vunpack.c.0.s8 %v420
      %v422 = vlaneseq
      %v423 = vshrl.u32 %v422, 7
      %v424 = vsub.s32 %v421, %v423
      %v425 = vrot.slane %v417, %v424
      %v426 = vcombine.high %v425, %v425
      %v428 = vpack.i.b16 %v425, %v425
      %v430 = vlaneseq
      %v431 = vshrl.u32 %v430, 7
      %v432 = vsub.s32 1, %v431
      %v433 = vrot.slane %v428, %v432
      %v435 = vpack.i.b16 %v426, %v426
      %v437 = vlaneseq
      %v438 = vshrl.u32 %v437, 7
      %v439 = vsub.s32 1, %v438
      %v440 = vrot.slane %v435, %v439
      %443 = vrot.lane.b32.xlu0 %v433, 113
      %v444 = vpop.permute.xlu0 %443
      %445 = vrot.lane.b32.xlu0 %v440, 113
      %v446 = vpop.permute.xlu0 %445
      %vm447 = vcmask 924672
      %v448 = vsel %vm447, %v444, %v446
      %v452 = vmul.bf16 %v444, 0
      %v453 = vmul.bf16 %v349, %v448
      %v454 = vmul.bf16 %v350, %v446
      %455 = vrot.lane.b32.xlu0 %v367, 127
      %v456 = vpop.permute.xlu0 %455
      %457 = vrot.lane.b32.xlu0 %v374, 127
      %v458 = vpop.permute.xlu0 %457
      %vm459 = vcmask 1039360
      %v460 = vsel %vm459, %v456, %v458
      %v464 = vmul.bf16 %v456, 0
      %v465 = vmul.bf16 %v349, %v460
      %v466 = vmul.bf16 %v350, %v458
      %v467 = vmul.bf16 %v349, %v395
      %v468 = vmul.bf16 %v350, %v402
      %469 = vrot.lane.b32.xlu0 %v433, 1
      %v470 = vpop.permute.xlu0 %469
      %471 = vrot.lane.b32.xlu0 %v440, 1
      %v472 = vpop.permute.xlu0 %471
      %vm473 = vcmask 7168
      %v474 = vsel %vm473, %v470, %v472
      %v478 = vmul.bf16 %v349, %v470
      %v479 = vmul.bf16 %v350, %v474
      %v480 = vmul.bf16 %v472, 0
      %481 = vrot.lane.b32.xlu0 %v367, 15
      %v482 = vpop.permute.xlu0 %481
      %483 = vrot.lane.b32.xlu0 %v374, 15
      %v484 = vpop.permute.xlu0 %483
      %vm485 = vcmask 121856
      %v486 = vsel %vm485, %v482, %v484
      %v490 = vmul.bf16 %v349, %v482
      %v491 = vmul.bf16 %v350, %v486
      %v492 = vmul.bf16 %v484, 0
      %493 = vrot.lane.b32.xlu0 %v395, 16
      %v494 = vpop.permute.xlu0 %493
      %495 = vrot.lane.b32.xlu0 %v402, 16
      %v496 = vpop.permute.xlu0 %495
      %vm497 = vcmask 130048
      %v498 = vsel %vm497, %v494, %v496
      %v502 = vmul.bf16 %v349, %v494
      %v503 = vmul.bf16 %v350, %v498
      %v504 = vmul.bf16 %v496, 0
      %505 = vrot.lane.b32.xlu0 %v433, 17
      %v506 = vpop.permute.xlu0 %505
      %507 = vrot.lane.b32.xlu0 %v440, 17
      %v508 = vpop.permute.xlu0 %507
      %vm509 = vcmask 138240
      %v510 = vsel %vm509, %v506, %v508
      %v514 = vmul.bf16 %v349, %v506
      %v515 = vmul.bf16 %v350, %v510
      %v516 = vmul.bf16 %v508, 0
      %v520 = vrot.slane %v414, 4
      %v521 = vrot.slane %v415, 4
      %v522 = vrot.slane %v416, 4
      %523 = vrot.lane.b32.xlu0 %v520, 127
      %v524 = vpop.permute.xlu0 %523
      %525 = vrot.lane.b32.xlu0 %v521, 127
      %v526 = vpop.permute.xlu0 %525
      %527 = vrot.lane.b32.xlu0 %v522, 127
      %v528 = vpop.permute.xlu0 %527
      %v529 = vsel %vm459, %v524, %v526
      %v530 = vsel %vm459, %v526, %v528
      %534 = vrot.lane.b32.xlu0 %v452, 126
      %v535 = vpop.permute.xlu0 %534
      %536 = vrot.lane.b32.xlu0 %v453, 126
      %v537 = vpop.permute.xlu0 %536
      %538 = vrot.lane.b32.xlu0 %v454, 126
      %v539 = vpop.permute.xlu0 %538
      %vm540 = vcmask 1031168
      %v541 = vsel %vm540, %v535, %v537
      %v542 = vsel %vm540, %v537, %v539
      %v546 = vrot.slane %v464, 4
      %v547 = vrot.slane %v465, 4
      %v548 = vrot.slane %v466, 4
      %549 = vrot.lane.b32.xlu0 %v546, 112
      %v550 = vpop.permute.xlu0 %549
      %551 = vrot.lane.b32.xlu0 %v547, 112
      %v552 = vpop.permute.xlu0 %551
      %553 = vrot.lane.b32.xlu0 %v548, 112
      %v554 = vpop.permute.xlu0 %553
      %v555 = vsel %vm409, %v550, %v552
      %v556 = vsel %vm409, %v552, %v554
      %559 = vrot.lane.b32.xlu0 %v467, 111
      %v560 = vpop.permute.xlu0 %559
      %561 = vrot.lane.b32.xlu0 %v468, 111
      %v562 = vpop.permute.xlu0 %561
      %v563 = vsel %vm381, %v560, %v562
      %v567 = vrot.slane %v478, 4
      %v568 = vrot.slane %v479, 4
      %v569 = vrot.slane %v480, 4
      %570 = vrot.lane.b32.xlu0 %v567, 110
      %v571 = vpop.permute.xlu0 %570
      %572 = vrot.lane.b32.xlu0 %v568, 110
      %v573 = vpop.permute.xlu0 %572
      %574 = vrot.lane.b32.xlu0 %v569, 110
      %v575 = vpop.permute.xlu0 %574
      %vm576 = vcmask 900096
      %v577 = vsel %vm576, %v571, %v573
      %v578 = vsel %vm576, %v573, %v575
      %582 = vrot.lane.b32.xlu0 %v490, 96
      %v583 = vpop.permute.xlu0 %582
      %584 = vrot.lane.b32.xlu0 %v491, 96
      %v585 = vpop.permute.xlu0 %584
      %586 = vrot.lane.b32.xlu0 %v492, 96
      %v587 = vpop.permute.xlu0 %586
      %vm588 = vcmask 785408
      %v589 = vsel %vm588, %v583, %v585
      %v590 = vsel %vm588, %v585, %v587
      %v594 = vrot.slane %v502, 4
      %v595 = vrot.slane %v503, 4
      %v596 = vrot.slane %v504, 4
      %597 = vrot.lane.b32.xlu0 %v594, 95
      %v598 = vpop.permute.xlu0 %597
      %599 = vrot.lane.b32.xlu0 %v595, 95
      %v600 = vpop.permute.xlu0 %599
      %601 = vrot.lane.b32.xlu0 %v596, 95
      %v602 = vpop.permute.xlu0 %601
      %vm603 = vcmask 777216
      %v604 = vsel %vm603, %v598, %v600
      %v605 = vsel %vm603, %v600, %v602
      %609 = vrot.lane.b32.xlu0 %v514, 94
      %v610 = vpop.permute.xlu0 %609
      %611 = vrot.lane.b32.xlu0 %v515, 94
      %v612 = vpop.permute.xlu0 %611
      %613 = vrot.lane.b32.xlu0 %v516, 94
      %v614 = vpop.permute.xlu0 %613
      %vm615 = vcmask 769024
      %v616 = vsel %vm615, %v610, %v612
      %v617 = vsel %vm615, %v612, %v614
      %vm618 = vcmask 1043456
      %v621 = vsel %vm618, %v386, %v529
      %v624 = vsel %vm618, %v387, %v530
      %v627 = vsel %vm618, %v388, %v528
      %v630 = vsel %vm618, %v541, %v555
      %v633 = vsel %vm618, %v542, %v556
      %v636 = vsel %vm618, %v539, %v554
      %v639 = vsel %vm618, %v560, %v571
      %v642 = vsel %vm618, %v563, %v577
      %v645 = vsel %vm618, %v562, %v578
      %v648 = vsel %vm618, %v583, %v598
      %v651 = vsel %vm618, %v589, %v604
      %v654 = vsel %vm618, %v590, %v605
      %v655 = vld [vmem:[%s1] sm:$0xf]
      %v656 = vld [vmem:[%s2] sm:$0xff]
      %658 = vset.pattern.permute.xlu0 0
      %659 = vperm.xlu0 %658, %v656
      %v660 = vpop.permute.xlu0 %659
      %674 = vrot.lane.b32.xlu0 %v621, 17
      %v675 = vpop.permute.xlu0 %674
      %676 = vrot.lane.b32.xlu0 %v624, 17
      %v677 = vpop.permute.xlu0 %676
      %678 = vrot.lane.b32.xlu0 %v627, 17
      %v679 = vpop.permute.xlu0 %678
      %680 = vrot.lane.b32.xlu0 %v630, 17
      %v681 = vpop.permute.xlu0 %680
      %682 = vrot.lane.b32.xlu0 %v633, 17
      %v683 = vpop.permute.xlu0 %682
      %684 = vrot.lane.b32.xlu0 %v636, 17
      %v685 = vpop.permute.xlu0 %684
      %686 = vrot.lane.b32.xlu0 %v639, 17
      %v687 = vpop.permute.xlu0 %686
      %688 = vrot.lane.b32.xlu0 %v642, 17
      %v689 = vpop.permute.xlu0 %688
      %690 = vrot.lane.b32.xlu0 %v645, 17
      %v691 = vpop.permute.xlu0 %690
      %692 = vrot.lane.b32.xlu0 %v648, 17
      %v693 = vpop.permute.xlu0 %692
      %694 = vrot.lane.b32.xlu0 %v651, 17
      %v695 = vpop.permute.xlu0 %694
      %696 = vrot.lane.b32.xlu0 %v654, 17
      %v697 = vpop.permute.xlu0 %696
      %698 = vrot.lane.b32.xlu0 %v610, 17
      %v699 = vpop.permute.xlu0 %698
      %700 = vrot.lane.b32.xlu0 %v616, 17
      %v701 = vpop.permute.xlu0 %700
      %702 = vrot.lane.b32.xlu0 %v617, 17
      %v703 = vpop.permute.xlu0 %702
      %v704 = vsel %vm509, %v675, %v677
      %v705 = vsel %vm509, %v677, %v679
      %v706 = vsel %vm509, %v681, %v683
      %v707 = vsel %vm509, %v683, %v685
      %v708 = vsel %vm509, %v687, %v689
      %v709 = vsel %vm509, %v689, %v691
      %v710 = vsel %vm509, %v693, %v695
      %v711 = vsel %vm509, %v695, %v697
      %v712 = vsel %vm509, %v699, %v701
      %v713 = vsel %vm509, %v701, %v703
      %vm722 = vcmask 588800
      %v724 = vsel %vm722, %v655, 0
      %v727 = vsel %vm618, %v712, 0
      %v730 = vsel %vm618, %v713, 0
      %732 = vmatprep.subr.bf16.mxu0 %v705
      %733 = vmatpush1.bf16.msra.mxu0 %v704
      %734 = vmatprep.subr.bf16.mxu0 %v707
      %735 = vmatpush1.bf16.msra.mxu0 %v706
      %736 = vmatprep.subr.bf16.mxu0 %v709
      %737 = vmatpush1.bf16.msra.mxu0 %v708
      %738 = vmatprep.subr.bf16.mxu0 %v711
      %739 = vmatpush1.bf16.msra.mxu0 %v710
      %740 = vmatprep.subr.bf16.mxu0 %v730
      %741 = vmatpush1.bf16.msra.mxu0 %v727
      %742 = vmatprep.subr.bf16.mxu0 0
      %743 = vmatpush1.bf16.msra.mxu0 0
      %744 = vmatprep.subr.bf16.mxu0 0
      %745 = vmatpush1.bf16.msra.mxu0 0
      %746 = vmatprep.subr.bf16.mxu0 0
      %747 = vmatpush1.bf16.msra.mxu0 0
      %748 = vmatprep.subr.bf16.mxu0 0
      %749 = vmatpush1.bf16.msra.mxu0 0
      %750 = vmatprep.subr.bf16.mxu0 0
      %751 = vmatpush1.bf16.msra.mxu0 0
      %752 = vmatprep.subr.bf16.mxu0 0
      %753 = vmatpush1.bf16.msra.mxu0 0
      %754 = vmatprep.subr.bf16.mxu0 0
      %755 = vmatpush1.bf16.msra.mxu0 0
      %756 = vmatprep.subr.bf16.mxu0 0
      %757 = vmatpush1.bf16.msra.mxu0 0
      %758 = vmatprep.subr.bf16.mxu0 0
      %759 = vmatpush1.bf16.msra.mxu0 0
      %760 = vmatprep.subr.bf16.mxu0 0
      %761 = vmatpush1.bf16.msra.mxu0 0
      %762 = vmatprep.subr.bf16.mxu0 0
      %763 = vmatpush1.bf16.msra.mxu0 0
      %764 = vmatprep.mubr.bf16.mxu0 0
      %765 = vmatmul.mubr.bf16.gmra.mrb[0].mxu0 %v724
      %v766 = vpop.f32.mrb[0].mxu0
      %v767 = vadd.f32 %v660, %v766
      %v768 = vpop.f32.mrb[0].mxu0
      %v769 = vadd.f32 %v660, %v768
      %v770 = vpop.f32.mrb[0].mxu0
      %v771 = vpop.f32.mrb[0].mxu0
      %772 = vdwg.mxu0
      %v773 = vpack.c.bf16 %v767, %v767
      %v774 = vpack.c.bf16 %v769, %v769
      %v777 = vunpack.c.l.b16 %v773
      %v778 = vunpack.c.l.b16 %v774
      %v779 = vpack.c.b16 %v778, %v777
      %781 = vst [vmem:[%s318] sm:$0xff] %v779
      %v782 = vunpack.c.l.bf16 %v773
      %v783 = vunpack.c.l.bf16 %v774
      %v784 = vadd.f32 %v782, %v783
      %785 = vadd.xlane.f32.xlu0 %v784
      %v786 = vpop.xlane.xlu0 %785
      %vm787 = vcmask 7168
      %788 = vst.msk [vmem:[%s322] sm:$0xff] %vm787, %v786
      %v789 = vmul.f32 %v782, %v782
      %v790 = vmul.f32 %v783, %v783
      %v791 = vadd.f32 %v789, %v790
      %792 = vadd.xlane.f32.xlu0 %v791
      %v793 = vpop.xlane.xlu0 %792
      %794 = vst.msk [vmem:[%s326] sm:$0xff] %vm787, %v793
      %p795 = scmp.lt.s32.totalorder %s20, 1
      %s796 = scalar_select %p795, %s20, 1
      %s797 = smul.addr %s796, 2
      %s798 = smul.addr %s797, 4
      %s799 = scalar_lea.vmem %s6, %s798
      %p800 = scmp.lt.s32.totalorder %s20, 1
      %s801 = scalar_select %p800, %s20, 1
      %s802 = smul.addr %s801, 8
      %s803 = scalar_lea.vmem %s7, %s802
      %p804 = scmp.lt.s32.totalorder %s20, 1
      %s805 = scalar_select %p804, %s20, 1
      %s806 = smul.addr %s805, 8
      %s807 = scalar_lea.vmem %s8, %s806
      // Predicated region
      $region45: #{double_conv.4} parent=43 // pred_check
        %p808 = pneg %p169
      $region46: #{double_conv.4} parent=43 // pred_check_branch
        %810 = sbr.rel (%p808) target = $region48
      $region47: #{double_conv.4} parent=43 // pred_region
        _
      $region48: #{double_conv.4} parent=43 // pred_fallthru
        _
      // Predicated region
      $region49: #{double_conv.4} parent=43 // pred_check
        %p811 = pneg %p195
      $region50: #{double_conv.4} parent=43 // pred_check_branch
        %813 = sbr.rel (%p811) target = $region52
      $region51: #{double_conv.4} parent=43 // pred_region
        _
      $region52: #{double_conv.4} parent=43 // pred_fallthru
        _
      // Predicated region
      $region53: #{double_conv.4} parent=43 // pred_check
        %p814 = pneg %p221
      $region54: #{double_conv.4} parent=43 // pred_check_branch
        %816 = sbr.rel (%p814) target = $region56
      $region55: #{double_conv.4} parent=43 // pred_region
        _
      $region56: #{double_conv.4} parent=43 // pred_fallthru
        _
    $region44: #{double_conv.4} parent=5 // pred_fallthru
      _
    %p817 = scmp.le.s32.totalorder 2, %s15
    // Predicated region
    $region57: #{double_conv.4} parent=5 // pred_check
      %p818 = pneg %p817
    $region58: #{double_conv.4} parent=5 // pred_check_branch
      %820 = sbr.rel (%p818) target = $region60
    $region59: #{double_conv.4} parent=5 // pred_region
      %s821 = ssub.s32 %s15, 2
      // Predicated region
      $region61: #{double_conv.4} parent=59 // pred_check
        %p822 = pneg %p175
      $region62: #{double_conv.4} parent=59 // pred_check_branch
        %824 = sbr.rel (%p822) target = $region64
      $region63: #{double_conv.4} parent=59 // pred_region
        %p825 = scmp.lt.s32.totalorder %s21, 1
        %s826 = scalar_select %p825, %s21, 1
        %s827 = smul.addr %s826, 2
        %s828 = smul.addr %s827, 4
        %s829 = scalar_lea.vmem %s6, %s828
      $region64: #{double_conv.4} parent=59 // pred_fallthru
        _
      // Predicated region
      $region65: #{double_conv.4} parent=59 // pred_check
        %p830 = pneg %p201
      $region66: #{double_conv.4} parent=59 // pred_check_branch
        %832 = sbr.rel (%p830) target = $region68
      $region67: #{double_conv.4} parent=59 // pred_region
        %p833 = scmp.lt.s32.totalorder %s21, 1
        %s834 = scalar_select %p833, %s21, 1
        %s835 = smul.addr %s834, 8
        %s836 = scalar_lea.vmem %s7, %s835
      $region68: #{double_conv.4} parent=59 // pred_fallthru
        _
      // Predicated region
      $region69: #{double_conv.4} parent=59 // pred_check
        %p837 = pneg %p227
      $region70: #{double_conv.4} parent=59 // pred_check_branch
        %839 = sbr.rel (%p837) target = $region72
      $region71: #{double_conv.4} parent=59 // pred_region
        %p840 = scmp.lt.s32.totalorder %s21, 1
        %s841 = scalar_select %p840, %s21, 1
        %s842 = smul.addr %s841, 8
        %s843 = scalar_lea.vmem %s8, %s842
      $region72: #{double_conv.4} parent=59 // pred_fallthru
        _
    $region60: #{double_conv.4} parent=5 // pred_fallthru
      _
  $region6: #{double_conv.4} parent=0 // loop_footer
    %s19 = sadd.s32 1, %s15
  $region7: #{double_conv.4} parent=0 // loop_footer_branch
    %14 = sbr.rel target = $region3
  $region8: #{double_conv.4} parent=0 // loop_exit
    _

</llo_original>
